<compile_context>
chip_gen: v7x
topology: tpu7x:2x2x1
jax: 0.10.0
libtpu: 0.0.40
codegen_flags: <defaults>
</compile_context>

<pallas_src>
import functools

import jax
import jax.numpy as jnp
from jax import lax
from jax.experimental import pallas as pl
from jax.experimental.pallas import tpu as pltpu


def dsqn_kernel(xg1_ref, wfused_ref, whh2_ref, b2_ref, out_ref, *,
                num_steps, hidden, threshold):
    """Whole DSQN forward (2 stacked SLSTMs unrolled over time), state in vregs."""
    H = hidden
    f32 = jnp.float32
    B = xg1_ref.shape[0]
    cd = wfused_ref.dtype          # matmul operand dtype (bf16 or f32)

    # ---- hoist every load / broadcast out of the (unrolled) time loop ----
    xg1 = xg1_ref[...]             # (B, 4H)  = x @ wih1 + b1, time-invariant
    wfused = wfused_ref[...]       # (2H, 8H) = blockdiag(wih2, whh1)
    whh2 = whh2_ref[...]           # (H, 4H)
    b2b = jnp.broadcast_to(b2_ref[...], (B, 4 * H)).astype(f32)  # hoisted

    # Lane mask selecting the "g" gate (tanh) in torch gate order [i, f, g, o].
    col = lax.broadcasted_iota(jnp.int32, (B, 4 * H), 1)
    g_mask = (col >= 2 * H) & (col < 3 * H)

    def lstm_gates(pre, c_prev):
        # One full-width EUP tanh per layer/step: sigmoid(x) = 0.5*(1+tanh(x/2)),
        # combined with two cheap VPU selects instead of separate sigmoid pushes.
        t = jnp.tanh(jnp.where(g_mask, pre, 0.5 * pre))
        act = jnp.where(g_mask, t, 0.5 * t + 0.5)
        i = act[:, 0 * H:1 * H]
        f = act[:, 1 * H:2 * H]
        g = act[:, 2 * H:3 * H]
        o = act[:, 3 * H:4 * H]
        c_new = f * c_prev + i * g
        h_new = o * jnp.tanh(c_new)
        return h_new, c_new

    def step(carry):
        # rec1 = h1(t-1) @ whh1 and rec2 = h2(t-1) @ whh2 were produced in the
        # previous step, so this step's critical path is 1 matmul + 1 gate-set.
        c1, c2, rec1, rec2, acc = carry

        # ---- SLSTM layer 1 (reset_mechanism="none") ----
        h1, c1 = lstm_gates(xg1 + rec1, c1)
        spk1 = (h1 > threshold).astype(f32)

        # One fused MXU push: [spk1 | h1] @ blockdiag(wih2, whh1)
        #   cols [0:4H)  = spk1 @ wih2   -> layer-2 input gates (this step)
        #   cols [4H:8H) = h1   @ whh1   -> layer-1 recurrence (next step)
        # (Keeping the lane concat: any concat-free packing either still needs
        #  a lane move or doubles the EUP width, which is worse here.)
        lhs = jnp.concatenate([spk1, h1], axis=-1).astype(cd)
        fused = jnp.dot(lhs, wfused, preferred_element_type=f32)

        # ---- SLSTM layer 2 ----
        h2, c2 = lstm_gates(fused[:, :4 * H] + rec2 + b2b, c2)
        spk2 = (h2 > threshold).astype(f32)

        # Off-critical-path small matmul feeding NEXT step's layer-2 pre; the
        # scheduler overlaps it with next step's layer-1 gates when unrolled.
        rec2_next = jnp.dot(h2.astype(cd), whh2, preferred_element_type=f32)
        rec1_next = fused[:, 4 * H:]

        return c1, c2, rec1_next, rec2_next, acc + spk2

    zH = jnp.zeros((B, H), f32)
    z4H = jnp.zeros((B, 4 * H), f32)
    carry = (zH, zH, z4H, z4H, zH)   # h1(-1)=h2(-1)=0 -> both recurrences start at 0

    if num_steps <= 32:
        # num_steps is a small static int -> full unroll (recurrence is serial).
        for _ in range(num_steps):
            carry = step(carry)
    else:
        # Long horizons: bound code size; only ~15 vregs live so unroll=8 is free.
        carry = lax.fori_loop(0, num_steps, lambda _, c: step(c), carry,
                              unroll=8)

    out_ref[...] = carry[4] * (1.0 / num_steps)


def dsqn_forward(x, params, *, num_steps=10, threshold=1.0,
                 compute_dtype=jnp.bfloat16):
    """DSQN forward.  compute_dtype is the MXU operand dtype (state stays f32)."""
    B = x.shape[0]
    H = params["whh1"].shape[0]

    # Time-invariant layer-1 input contribution computed once in XLA (also the
    # only K=69 contraction, kept out of Mosaic).
    xg1 = (x.astype(jnp.float32) @ params["wih1"] + params["b1"]).astype(jnp.float32)

    # blockdiag(wih2, whh1): rows [0:H) -> cols [0:4H), rows [H:2H) -> cols [4H:8H).
    z = jnp.zeros((H, 4 * H), jnp.float32)
    wfused = jnp.concatenate(
        [jnp.concatenate([params["wih2"], z], axis=1),
         jnp.concatenate([z, params["whh1"]], axis=1)], axis=0).astype(compute_dtype)
    whh2 = params["whh2"].astype(compute_dtype)

    kernel = functools.partial(dsqn_kernel, num_steps=num_steps, hidden=H,
                               threshold=threshold)

    vmem = pl.BlockSpec(memory_space=pltpu.MemorySpace.VMEM)  # full-array blocks
    # Single program: total footprint < 100 KB (fine even for v7x's 64 MiB VMEM);
    # no grid — the time loop is serial and B is tiny.  If B grows, add a leading
    # batch grid axis with dimension_semantics=("parallel",) for megacore.
    return pl.pallas_call(
        kernel,
        out_shape=jax.ShapeDtypeStruct((B, H), jnp.float32),
        in_specs=[vmem] * 4,
        out_specs=vmem,
    )(xg1, wfused, whh2, params["b2"])


def dsqn_reference(x, params, num_steps=10, threshold=1.0):
    """Pure-JAX f32 reference of the same forward pass (unfused weights)."""
    H = params["whh1"].shape[0]
    B = x.shape[0]
    h1 = c1 = h2 = c2 = jnp.zeros((B, H), jnp.float32)
    acc = jnp.zeros((B, H), jnp.float32)

    def gates(pre, c_prev):
        i = jax.nn.sigmoid(pre[:, 0 * H:1 * H])
        f = jax.nn.sigmoid(pre[:, 1 * H:2 * H])
        g = jnp.tanh(pre[:, 2 * H:3 * H])
        o = jax.nn.sigmoid(pre[:, 3 * H:4 * H])
        c_new = f * c_prev + i * g
        return o * jnp.tanh(c_new), c_new

    xg1 = x @ params["wih1"] + params["b1"]
    for _ in range(num_steps):
        h1, c1 = gates(xg1 + h1 @ params["whh1"], c1)
        spk1 = (h1 > threshold).astype(jnp.float32)
        h2, c2 = gates(spk1 @ params["wih2"] + h2 @ params["whh2"] + params["b2"], c2)
        spk2 = (h2 > threshold).astype(jnp.float32)
        acc = acc + spk2
    return acc / num_steps


def init_params(key, input_size, hidden_size):
    """Deterministic init mimicking torch.nn.LSTMCell (uniform(+-1/sqrt(H)))."""
    ks = jax.random.split(key, 8)
    bound = 1.0 / float(hidden_size) ** 0.5
    u = lambda k, shape: jax.random.uniform(
        k, shape, jnp.float32, minval=-bound, maxval=bound)
    H4 = 4 * hidden_size
    return {
        # weights pre-transposed to (in_features, 4H), gate order [i, f, g, o]
        "wih1": u(ks[0], (input_size, H4)),
        "whh1": u(ks[1], (hidden_size, H4)),
        "b1": u(ks[2], (1, H4)) + u(ks[3], (1, H4)),  # b_ih + b_hh combined
        "wih2": u(ks[4], (hidden_size, H4)),
        "whh2": u(ks[5], (hidden_size, H4)),
        "b2": u(ks[6], (1, H4)) + u(ks[7], (1, H4)),
    }
    # TODO(synk): the module also defines `fc = nn.Linear(hidden, 3)` and
    # `beta`, but forward() never uses them, so they are omitted here.


if __name__ == "__main__":
    key = jax.random.PRNGKey(0)
    k_param, k_x = jax.random.split(key)

    batch, input_size, hidden_size, num_steps = 2, 69, 32, 10
    params = init_params(k_param, input_size, hidden_size)
    x = jax.random.uniform(k_x, (batch, input_size), jnp.float32,
                           minval=-1.0, maxval=1.0)

    # ---- strict checks on the f32 compute path ----
    # Default SLSTM threshold = 1.0 (faithful to the module): spikes never fire
    # because |h| <= 1, so the output is exactly zero.
    out = jax.block_until_ready(
        dsqn_forward(x, params, num_steps=num_steps, threshold=1.0,
                     compute_dtype=jnp.float32))
    ref = dsqn_reference(x, params, num_steps=num_steps, threshold=1.0)
    assert out.shape == (batch, hidden_size)
    assert jnp.allclose(out, ref, atol=1e-5), "mismatch vs reference (thr=1.0)"

    # Exercise the spiking path with a lower threshold.
    out2 = jax.block_until_ready(
        dsqn_forward(x, params, num_steps=num_steps, threshold=0.05,
                     compute_dtype=jnp.float32))
    ref2 = dsqn_reference(x, params, num_steps=num_steps, threshold=0.05)
    assert jnp.allclose(out2, ref2, atol=1e-5), "mismatch vs reference (thr=0.05)"

    # ---- default (bf16 MXU operands) perf path ----
    # bf16 rounding can flip a borderline spike (each flip changes an output
    # element by 1/num_steps), so only structural sanity checks here.
    out_bf = jax.block_until_ready(
        dsqn_forward(x, params, num_steps=num_steps, threshold=0.05))
    assert out_bf.shape == (batch, hidden_size)
    assert bool(jnp.all(jnp.isfinite(out_bf)))
    assert bool(jnp.all((out_bf >= 0.0) & (out_bf <= 1.0)))
    counts = out_bf * num_steps
    assert float(jnp.max(jnp.abs(counts - jnp.round(counts)))) < 1e-4, \
        "bf16 output is not a mean of binary spikes"
    # thr=1.0 must be exactly zero in bf16 too (spikes can never fire).
    out_bf1 = jax.block_until_ready(
        dsqn_forward(x, params, num_steps=num_steps, threshold=1.0))
    assert float(jnp.max(jnp.abs(out_bf1))) == 0.0

    print("KERNEL_OK")
</pallas_src>

<mosaic_0001>
module attributes {stable_mosaic.version = 11 : i64} {
  func.func @dsqn_kernel(%arg0: memref<2x128xf32, #tpu.memory_space<vmem>>, %arg1: memref<64x256xf32, #tpu.memory_space<vmem>>, %arg2: memref<32x128xf32, #tpu.memory_space<vmem>>, %arg3: memref<1x128xf32, #tpu.memory_space<vmem>>, %arg4: memref<2x32xf32, #tpu.memory_space<vmem>>) attributes {dimension_semantics = [], scalar_prefetch = 0 : i64, scratch_operands = 0 : i64, tpu.core_type = #tpu.core_type<tc>} {
    %c0 = arith.constant 0 : index
    %c0_0 = arith.constant 0 : index
    %0 = vector.load %arg0[%c0, %c0_0] : memref<2x128xf32, #tpu.memory_space<vmem>>, vector<2x128xf32>
    %c0_1 = arith.constant 0 : index
    %c0_2 = arith.constant 0 : index
    %1 = vector.load %arg1[%c0_1, %c0_2] : memref<64x256xf32, #tpu.memory_space<vmem>>, vector<64x256xf32>
    %c0_3 = arith.constant 0 : index
    %c0_4 = arith.constant 0 : index
    %2 = vector.load %arg2[%c0_3, %c0_4] : memref<32x128xf32, #tpu.memory_space<vmem>>, vector<32x128xf32>
    %c0_5 = arith.constant 0 : index
    %c0_6 = arith.constant 0 : index
    %3 = vector.load %arg3[%c0_5, %c0_6] : memref<1x128xf32, #tpu.memory_space<vmem>>, vector<1x128xf32>
    %4 = vector.shape_cast %3 : vector<1x128xf32> to vector<1x128xf32>
    %5 = vector.broadcast %4 : vector<1x128xf32> to vector<2x128xf32>
    %6 = tpu.iota {dimensions = array<i32: 1>} : vector<2x128xi32>
    %c64_i32 = arith.constant 64 : i32
    %7 = vector.broadcast %c64_i32 : i32 to vector<2x128xi32>
    %8 = arith.cmpi sge, %6, %7 : vector<2x128xi32>
    %c96_i32 = arith.constant 96 : i32
    %9 = vector.broadcast %c96_i32 : i32 to vector<2x128xi32>
    %10 = arith.cmpi slt, %6, %9 : vector<2x128xi32>
    %11 = arith.andi %8, %10 : vector<2x128xi1>
    %cst = arith.constant 0.000000e+00 : f32
    %12 = vector.broadcast %cst : f32 to vector<2x32xf32>
    %cst_7 = arith.constant 0.000000e+00 : f32
    %13 = vector.broadcast %cst_7 : f32 to vector<2x128xf32>
    %14 = arith.addf %0, %13 : vector<2x128xf32>
    %cst_8 = arith.constant 5.000000e-01 : f32
    %15 = vector.broadcast %cst_8 : f32 to vector<2x128xf32>
    %16 = arith.mulf %15, %14 : vector<2x128xf32>
    %17 = arith.select %11, %14, %16 : vector<2x128xi1>, vector<2x128xf32>
    %18 = math.tanh %17 : vector<2x128xf32>
    %cst_9 = arith.constant 5.000000e-01 : f32
    %19 = vector.broadcast %cst_9 : f32 to vector<2x128xf32>
    %20 = arith.mulf %19, %18 : vector<2x128xf32>
    %cst_10 = arith.constant 5.000000e-01 : f32
    %21 = vector.broadcast %cst_10 : f32 to vector<2x128xf32>
    %22 = arith.addf %20, %21 : vector<2x128xf32>
    %23 = arith.select %11, %18, %22 : vector<2x128xi1>, vector<2x128xf32>
    %24 = vector.extract_strided_slice %23 {offsets = [0, 0], sizes = [2, 32], strides = [1, 1]} : vector<2x128xf32> to vector<2x32xf32>
    %25 = vector.extract_strided_slice %23 {offsets = [0, 32], sizes = [2, 32], strides = [1, 1]} : vector<2x128xf32> to vector<2x32xf32>
    %26 = vector.extract_strided_slice %23 {offsets = [0, 64], sizes = [2, 32], strides = [1, 1]} : vector<2x128xf32> to vector<2x32xf32>
    %27 = vector.extract_strided_slice %23 {offsets = [0, 96], sizes = [2, 32], strides = [1, 1]} : vector<2x128xf32> to vector<2x32xf32>
    %28 = arith.mulf %25, %12 : vector<2x32xf32>
    %29 = arith.mulf %24, %26 : vector<2x32xf32>
    %30 = arith.addf %28, %29 : vector<2x32xf32>
    %31 = math.tanh %30 : vector<2x32xf32>
    %32 = arith.mulf %27, %31 : vector<2x32xf32>
    %cst_11 = arith.constant 1.000000e+00 : f32
    %33 = vector.broadcast %cst_11 : f32 to vector<2x32xf32>
    %34 = arith.cmpf ogt, %32, %33 : vector<2x32xf32>
    %35 = arith.extui %34 : vector<2x32xi1> to vector<2x32xi32>
    %36 = arith.sitofp %35 : vector<2x32xi32> to vector<2x32xf32>
    %37 = tpu.concatenate %36, %32 in 1 : vector<2x32xf32>, vector<2x32xf32> -> vector<2x64xf32>
    %cst_12 = arith.constant dense<0.000000e+00> : vector<2x256xf32>
    %38 = tpu.matmul %37, %1, %cst_12 {dimension_numbers = #tpu.dot_dimension_numbers<[1], [0], [0], [1], [0, 0, 1, 1], [], []>} : vector<2x64xf32>, vector<64x256xf32>, vector<2x256xf32> -> vector<2x256xf32>
    %39 = vector.extract_strided_slice %38 {offsets = [0, 0], sizes = [2, 128], strides = [1, 1]} : vector<2x256xf32> to vector<2x128xf32>
    %40 = arith.addf %39, %13 : vector<2x128xf32>
    %41 = arith.addf %40, %5 : vector<2x128xf32>
    %cst_13 = arith.constant 5.000000e-01 : f32
    %42 = vector.broadcast %cst_13 : f32 to vector<2x128xf32>
    %43 = arith.mulf %42, %41 : vector<2x128xf32>
    %44 = arith.select %11, %41, %43 : vector<2x128xi1>, vector<2x128xf32>
    %45 = math.tanh %44 : vector<2x128xf32>
    %cst_14 = arith.constant 5.000000e-01 : f32
    %46 = vector.broadcast %cst_14 : f32 to vector<2x128xf32>
    %47 = arith.mulf %46, %45 : vector<2x128xf32>
    %cst_15 = arith.constant 5.000000e-01 : f32
    %48 = vector.broadcast %cst_15 : f32 to vector<2x128xf32>
    %49 = arith.addf %47, %48 : vector<2x128xf32>
    %50 = arith.select %11, %45, %49 : vector<2x128xi1>, vector<2x128xf32>
    %51 = vector.extract_strided_slice %50 {offsets = [0, 0], sizes = [2, 32], strides = [1, 1]} : vector<2x128xf32> to vector<2x32xf32>
    %52 = vector.extract_strided_slice %50 {offsets = [0, 32], sizes = [2, 32], strides = [1, 1]} : vector<2x128xf32> to vector<2x32xf32>
    %53 = vector.extract_strided_slice %50 {offsets = [0, 64], sizes = [2, 32], strides = [1, 1]} : vector<2x128xf32> to vector<2x32xf32>
    %54 = vector.extract_strided_slice %50 {offsets = [0, 96], sizes = [2, 32], strides = [1, 1]} : vector<2x128xf32> to vector<2x32xf32>
    %55 = arith.mulf %52, %12 : vector<2x32xf32>
    %56 = arith.mulf %51, %53 : vector<2x32xf32>
    %57 = arith.addf %55, %56 : vector<2x32xf32>
    %58 = math.tanh %57 : vector<2x32xf32>
    %59 = arith.mulf %54, %58 : vector<2x32xf32>
    %cst_16 = arith.constant 1.000000e+00 : f32
    %60 = vector.broadcast %cst_16 : f32 to vector<2x32xf32>
    %61 = arith.cmpf ogt, %59, %60 : vector<2x32xf32>
    %62 = arith.extui %61 : vector<2x32xi1> to vector<2x32xi32>
    %63 = arith.sitofp %62 : vector<2x32xi32> to vector<2x32xf32>
    %cst_17 = arith.constant dense<0.000000e+00> : vector<2x128xf32>
    %64 = tpu.matmul %59, %2, %cst_17 {dimension_numbers = #tpu.dot_dimension_numbers<[1], [0], [0], [1], [0, 0, 1, 1], [], []>} : vector<2x32xf32>, vector<32x128xf32>, vector<2x128xf32> -> vector<2x128xf32>
    %65 = vector.extract_strided_slice %38 {offsets = [0, 128], sizes = [2, 128], strides = [1, 1]} : vector<2x256xf32> to vector<2x128xf32>
    %66 = arith.addf %12, %63 : vector<2x32xf32>
    %67 = arith.addf %0, %65 : vector<2x128xf32>
    %cst_18 = arith.constant 5.000000e-01 : f32
    %68 = vector.broadcast %cst_18 : f32 to vector<2x128xf32>
    %69 = arith.mulf %68, %67 : vector<2x128xf32>
    %70 = arith.select %11, %67, %69 : vector<2x128xi1>, vector<2x128xf32>
    %71 = math.tanh %70 : vector<2x128xf32>
    %cst_19 = arith.constant 5.000000e-01 : f32
    %72 = vector.broadcast %cst_19 : f32 to vector<2x128xf32>
    %73 = arith.mulf %72, %71 : vector<2x128xf32>
    %cst_20 = arith.constant 5.000000e-01 : f32
    %74 = vector.broadcast %cst_20 : f32 to vector<2x128xf32>
    %75 = arith.addf %73, %74 : vector<2x128xf32>
    %76 = arith.select %11, %71, %75 : vector<2x128xi1>, vector<2x128xf32>
    %77 = vector.extract_strided_slice %76 {offsets = [0, 0], sizes = [2, 32], strides = [1, 1]} : vector<2x128xf32> to vector<2x32xf32>
    %78 = vector.extract_strided_slice %76 {offsets = [0, 32], sizes = [2, 32], strides = [1, 1]} : vector<2x128xf32> to vector<2x32xf32>
    %79 = vector.extract_strided_slice %76 {offsets = [0, 64], sizes = [2, 32], strides = [1, 1]} : vector<2x128xf32> to vector<2x32xf32>
    %80 = vector.extract_strided_slice %76 {offsets = [0, 96], sizes = [2, 32], strides = [1, 1]} : vector<2x128xf32> to vector<2x32xf32>
    %81 = arith.mulf %78, %30 : vector<2x32xf32>
    %82 = arith.mulf %77, %79 : vector<2x32xf32>
    %83 = arith.addf %81, %82 : vector<2x32xf32>
    %84 = math.tanh %83 : vector<2x32xf32>
    %85 = arith.mulf %80, %84 : vector<2x32xf32>
    %cst_21 = arith.constant 1.000000e+00 : f32
    %86 = vector.broadcast %cst_21 : f32 to vector<2x32xf32>
    %87 = arith.cmpf ogt, %85, %86 : vector<2x32xf32>
    %88 = arith.extui %87 : vector<2x32xi1> to vector<2x32xi32>
    %89 = arith.sitofp %88 : vector<2x32xi32> to vector<2x32xf32>
    %90 = tpu.concatenate %89, %85 in 1 : vector<2x32xf32>, vector<2x32xf32> -> vector<2x64xf32>
    %cst_22 = arith.constant dense<0.000000e+00> : vector<2x256xf32>
    %91 = tpu.matmul %90, %1, %cst_22 {dimension_numbers = #tpu.dot_dimension_numbers<[1], [0], [0], [1], [0, 0, 1, 1], [], []>} : vector<2x64xf32>, vector<64x256xf32>, vector<2x256xf32> -> vector<2x256xf32>
    %92 = vector.extract_strided_slice %91 {offsets = [0, 0], sizes = [2, 128], strides = [1, 1]} : vector<2x256xf32> to vector<2x128xf32>
    %93 = arith.addf %92, %64 : vector<2x128xf32>
    %94 = arith.addf %93, %5 : vector<2x128xf32>
    %cst_23 = arith.constant 5.000000e-01 : f32
    %95 = vector.broadcast %cst_23 : f32 to vector<2x128xf32>
    %96 = arith.mulf %95, %94 : vector<2x128xf32>
    %97 = arith.select %11, %94, %96 : vector<2x128xi1>, vector<2x128xf32>
    %98 = math.tanh %97 : vector<2x128xf32>
    %cst_24 = arith.constant 5.000000e-01 : f32
    %99 = vector.broadcast %cst_24 : f32 to vector<2x128xf32>
    %100 = arith.mulf %99, %98 : vector<2x128xf32>
    %cst_25 = arith.constant 5.000000e-01 : f32
    %101 = vector.broadcast %cst_25 : f32 to vector<2x128xf32>
    %102 = arith.addf %100, %101 : vector<2x128xf32>
    %103 = arith.select %11, %98, %102 : vector<2x128xi1>, vector<2x128xf32>
    %104 = vector.extract_strided_slice %103 {offsets = [0, 0], sizes = [2, 32], strides = [1, 1]} : vector<2x128xf32> to vector<2x32xf32>
    %105 = vector.extract_strided_slice %103 {offsets = [0, 32], sizes = [2, 32], strides = [1, 1]} : vector<2x128xf32> to vector<2x32xf32>
    %106 = vector.extract_strided_slice %103 {offsets = [0, 64], sizes = [2, 32], strides = [1, 1]} : vector<2x128xf32> to vector<2x32xf32>
    %107 = vector.extract_strided_slice %103 {offsets = [0, 96], sizes = [2, 32], strides = [1, 1]} : vector<2x128xf32> to vector<2x32xf32>
    %108 = arith.mulf %105, %57 : vector<2x32xf32>
    %109 = arith.mulf %104, %106 : vector<2x32xf32>
    %110 = arith.addf %108, %109 : vector<2x32xf32>
    %111 = math.tanh %110 : vector<2x32xf32>
    %112 = arith.mulf %107, %111 : vector<2x32xf32>
    %cst_26 = arith.constant 1.000000e+00 : f32
    %113 = vector.broadcast %cst_26 : f32 to vector<2x32xf32>
    %114 = arith.cmpf ogt, %112, %113 : vector<2x32xf32>
    %115 = arith.extui %114 : vector<2x32xi1> to vector<2x32xi32>
    %116 = arith.sitofp %115 : vector<2x32xi32> to vector<2x32xf32>
    %cst_27 = arith.constant dense<0.000000e+00> : vector<2x128xf32>
    %117 = tpu.matmul %112, %2, %cst_27 {dimension_numbers = #tpu.dot_dimension_numbers<[1], [0], [0], [1], [0, 0, 1, 1], [], []>} : vector<2x32xf32>, vector<32x128xf32>, vector<2x128xf32> -> vector<2x128xf32>
    %118 = vector.extract_strided_slice %91 {offsets = [0, 128], sizes = [2, 128], strides = [1, 1]} : vector<2x256xf32> to vector<2x128xf32>
    %119 = arith.addf %66, %116 : vector<2x32xf32>
    %120 = arith.addf %0, %118 : vector<2x128xf32>
    %cst_28 = arith.constant 5.000000e-01 : f32
    %121 = vector.broadcast %cst_28 : f32 to vector<2x128xf32>
    %122 = arith.mulf %121, %120 : vector<2x128xf32>
    %123 = arith.select %11, %120, %122 : vector<2x128xi1>, vector<2x128xf32>
    %124 = math.tanh %123 : vector<2x128xf32>
    %cst_29 = arith.constant 5.000000e-01 : f32
    %125 = vector.broadcast %cst_29 : f32 to vector<2x128xf32>
    %126 = arith.mulf %125, %124 : vector<2x128xf32>
    %cst_30 = arith.constant 5.000000e-01 : f32
    %127 = vector.broadcast %cst_30 : f32 to vector<2x128xf32>
    %128 = arith.addf %126, %127 : vector<2x128xf32>
    %129 = arith.select %11, %124, %128 : vector<2x128xi1>, vector<2x128xf32>
    %130 = vector.extract_strided_slice %129 {offsets = [0, 0], sizes = [2, 32], strides = [1, 1]} : vector<2x128xf32> to vector<2x32xf32>
    %131 = vector.extract_strided_slice %129 {offsets = [0, 32], sizes = [2, 32], strides = [1, 1]} : vector<2x128xf32> to vector<2x32xf32>
    %132 = vector.extract_strided_slice %129 {offsets = [0, 64], sizes = [2, 32], strides = [1, 1]} : vector<2x128xf32> to vector<2x32xf32>
    %133 = vector.extract_strided_slice %129 {offsets = [0, 96], sizes = [2, 32], strides = [1, 1]} : vector<2x128xf32> to vector<2x32xf32>
    %134 = arith.mulf %131, %83 : vector<2x32xf32>
    %135 = arith.mulf %130, %132 : vector<2x32xf32>
    %136 = arith.addf %134, %135 : vector<2x32xf32>
    %137 = math.tanh %136 : vector<2x32xf32>
    %138 = arith.mulf %133, %137 : vector<2x32xf32>
    %cst_31 = arith.constant 1.000000e+00 : f32
    %139 = vector.broadcast %cst_31 : f32 to vector<2x32xf32>
    %140 = arith.cmpf ogt, %138, %139 : vector<2x32xf32>
    %141 = arith.extui %140 : vector<2x32xi1> to vector<2x32xi32>
    %142 = arith.sitofp %141 : vector<2x32xi32> to vector<2x32xf32>
    %143 = tpu.concatenate %142, %138 in 1 : vector<2x32xf32>, vector<2x32xf32> -> vector<2x64xf32>
    %cst_32 = arith.constant dense<0.000000e+00> : vector<2x256xf32>
    %144 = tpu.matmul %143, %1, %cst_32 {dimension_numbers = #tpu.dot_dimension_numbers<[1], [0], [0], [1], [0, 0, 1, 1], [], []>} : vector<2x64xf32>, vector<64x256xf32>, vector<2x256xf32> -> vector<2x256xf32>
    %145 = vector.extract_strided_slice %144 {offsets = [0, 0], sizes = [2, 128], strides = [1, 1]} : vector<2x256xf32> to vector<2x128xf32>
    %146 = arith.addf %145, %117 : vector<2x128xf32>
    %147 = arith.addf %146, %5 : vector<2x128xf32>
    %cst_33 = arith.constant 5.000000e-01 : f32
    %148 = vector.broadcast %cst_33 : f32 to vector<2x128xf32>
    %149 = arith.mulf %148, %147 : vector<2x128xf32>
    %150 = arith.select %11, %147, %149 : vector<2x128xi1>, vector<2x128xf32>
    %151 = math.tanh %150 : vector<2x128xf32>
    %cst_34 = arith.constant 5.000000e-01 : f32
    %152 = vector.broadcast %cst_34 : f32 to vector<2x128xf32>
    %153 = arith.mulf %152, %151 : vector<2x128xf32>
    %cst_35 = arith.constant 5.000000e-01 : f32
    %154 = vector.broadcast %cst_35 : f32 to vector<2x128xf32>
    %155 = arith.addf %153, %154 : vector<2x128xf32>
    %156 = arith.select %11, %151, %155 : vector<2x128xi1>, vector<2x128xf32>
    %157 = vector.extract_strided_slice %156 {offsets = [0, 0], sizes = [2, 32], strides = [1, 1]} : vector<2x128xf32> to vector<2x32xf32>
    %158 = vector.extract_strided_slice %156 {offsets = [0, 32], sizes = [2, 32], strides = [1, 1]} : vector<2x128xf32> to vector<2x32xf32>
    %159 = vector.extract_strided_slice %156 {offsets = [0, 64], sizes = [2, 32], strides = [1, 1]} : vector<2x128xf32> to vector<2x32xf32>
    %160 = vector.extract_strided_slice %156 {offsets = [0, 96], sizes = [2, 32], strides = [1, 1]} : vector<2x128xf32> to vector<2x32xf32>
    %161 = arith.mulf %158, %110 : vector<2x32xf32>
    %162 = arith.mulf %157, %159 : vector<2x32xf32>
    %163 = arith.addf %161, %162 : vector<2x32xf32>
    %164 = math.tanh %163 : vector<2x32xf32>
    %165 = arith.mulf %160, %164 : vector<2x32xf32>
    %cst_36 = arith.constant 1.000000e+00 : f32
    %166 = vector.broadcast %cst_36 : f32 to vector<2x32xf32>
    %167 = arith.cmpf ogt, %165, %166 : vector<2x32xf32>
    %168 = arith.extui %167 : vector<2x32xi1> to vector<2x32xi32>
    %169 = arith.sitofp %168 : vector<2x32xi32> to vector<2x32xf32>
    %cst_37 = arith.constant dense<0.000000e+00> : vector<2x128xf32>
    %170 = tpu.matmul %165, %2, %cst_37 {dimension_numbers = #tpu.dot_dimension_numbers<[1], [0], [0], [1], [0, 0, 1, 1], [], []>} : vector<2x32xf32>, vector<32x128xf32>, vector<2x128xf32> -> vector<2x128xf32>
    %171 = vector.extract_strided_slice %144 {offsets = [0, 128], sizes = [2, 128], strides = [1, 1]} : vector<2x256xf32> to vector<2x128xf32>
    %172 = arith.addf %119, %169 : vector<2x32xf32>
    %173 = arith.addf %0, %171 : vector<2x128xf32>
    %cst_38 = arith.constant 5.000000e-01 : f32
    %174 = vector.broadcast %cst_38 : f32 to vector<2x128xf32>
    %175 = arith.mulf %174, %173 : vector<2x128xf32>
    %176 = arith.select %11, %173, %175 : vector<2x128xi1>, vector<2x128xf32>
    %177 = math.tanh %176 : vector<2x128xf32>
    %cst_39 = arith.constant 5.000000e-01 : f32
    %178 = vector.broadcast %cst_39 : f32 to vector<2x128xf32>
    %179 = arith.mulf %178, %177 : vector<2x128xf32>
    %cst_40 = arith.constant 5.000000e-01 : f32
    %180 = vector.broadcast %cst_40 : f32 to vector<2x128xf32>
    %181 = arith.addf %179, %180 : vector<2x128xf32>
    %182 = arith.select %11, %177, %181 : vector<2x128xi1>, vector<2x128xf32>
    %183 = vector.extract_strided_slice %182 {offsets = [0, 0], sizes = [2, 32], strides = [1, 1]} : vector<2x128xf32> to vector<2x32xf32>
    %184 = vector.extract_strided_slice %182 {offsets = [0, 32], sizes = [2, 32], strides = [1, 1]} : vector<2x128xf32> to vector<2x32xf32>
    %185 = vector.extract_strided_slice %182 {offsets = [0, 64], sizes = [2, 32], strides = [1, 1]} : vector<2x128xf32> to vector<2x32xf32>
    %186 = vector.extract_strided_slice %182 {offsets = [0, 96], sizes = [2, 32], strides = [1, 1]} : vector<2x128xf32> to vector<2x32xf32>
    %187 = arith.mulf %184, %136 : vector<2x32xf32>
    %188 = arith.mulf %183, %185 : vector<2x32xf32>
    %189 = arith.addf %187, %188 : vector<2x32xf32>
    %190 = math.tanh %189 : vector<2x32xf32>
    %191 = arith.mulf %186, %190 : vector<2x32xf32>
    %cst_41 = arith.constant 1.000000e+00 : f32
    %192 = vector.broadcast %cst_41 : f32 to vector<2x32xf32>
    %193 = arith.cmpf ogt, %191, %192 : vector<2x32xf32>
    %194 = arith.extui %193 : vector<2x32xi1> to vector<2x32xi32>
    %195 = arith.sitofp %194 : vector<2x32xi32> to vector<2x32xf32>
    %196 = tpu.concatenate %195, %191 in 1 : vector<2x32xf32>, vector<2x32xf32> -> vector<2x64xf32>
    %cst_42 = arith.constant dense<0.000000e+00> : vector<2x256xf32>
    %197 = tpu.matmul %196, %1, %cst_42 {dimension_numbers = #tpu.dot_dimension_numbers<[1], [0], [0], [1], [0, 0, 1, 1], [], []>} : vector<2x64xf32>, vector<64x256xf32>, vector<2x256xf32> -> vector<2x256xf32>
    %198 = vector.extract_strided_slice %197 {offsets = [0, 0], sizes = [2, 128], strides = [1, 1]} : vector<2x256xf32> to vector<2x128xf32>
    %199 = arith.addf %198, %170 : vector<2x128xf32>
    %200 = arith.addf %199, %5 : vector<2x128xf32>
    %cst_43 = arith.constant 5.000000e-01 : f32
    %201 = vector.broadcast %cst_43 : f32 to vector<2x128xf32>
    %202 = arith.mulf %201, %200 : vector<2x128xf32>
    %203 = arith.select %11, %200, %202 : vector<2x128xi1>, vector<2x128xf32>
    %204 = math.tanh %203 : vector<2x128xf32>
    %cst_44 = arith.constant 5.000000e-01 : f32
    %205 = vector.broadcast %cst_44 : f32 to vector<2x128xf32>
    %206 = arith.mulf %205, %204 : vector<2x128xf32>
    %cst_45 = arith.constant 5.000000e-01 : f32
    %207 = vector.broadcast %cst_45 : f32 to vector<2x128xf32>
    %208 = arith.addf %206, %207 : vector<2x128xf32>
    %209 = arith.select %11, %204, %208 : vector<2x128xi1>, vector<2x128xf32>
    %210 = vector.extract_strided_slice %209 {offsets = [0, 0], sizes = [2, 32], strides = [1, 1]} : vector<2x128xf32> to vector<2x32xf32>
    %211 = vector.extract_strided_slice %209 {offsets = [0, 32], sizes = [2, 32], strides = [1, 1]} : vector<2x128xf32> to vector<2x32xf32>
    %212 = vector.extract_strided_slice %209 {offsets = [0, 64], sizes = [2, 32], strides = [1, 1]} : vector<2x128xf32> to vector<2x32xf32>
    %213 = vector.extract_strided_slice %209 {offsets = [0, 96], sizes = [2, 32], strides = [1, 1]} : vector<2x128xf32> to vector<2x32xf32>
    %214 = arith.mulf %211, %163 : vector<2x32xf32>
    %215 = arith.mulf %210, %212 : vector<2x32xf32>
    %216 = arith.addf %214, %215 : vector<2x32xf32>
    %217 = math.tanh %216 : vector<2x32xf32>
    %218 = arith.mulf %213, %217 : vector<2x32xf32>
    %cst_46 = arith.constant 1.000000e+00 : f32
    %219 = vector.broadcast %cst_46 : f32 to vector<2x32xf32>
    %220 = arith.cmpf ogt, %218, %219 : vector<2x32xf32>
    %221 = arith.extui %220 : vector<2x32xi1> to vector<2x32xi32>
    %222 = arith.sitofp %221 : vector<2x32xi32> to vector<2x32xf32>
    %cst_47 = arith.constant dense<0.000000e+00> : vector<2x128xf32>
    %223 = tpu.matmul %218, %2, %cst_47 {dimension_numbers = #tpu.dot_dimension_numbers<[1], [0], [0], [1], [0, 0, 1, 1], [], []>} : vector<2x32xf32>, vector<32x128xf32>, vector<2x128xf32> -> vector<2x128xf32>
    %224 = vector.extract_strided_slice %197 {offsets = [0, 128], sizes = [2, 128], strides = [1, 1]} : vector<2x256xf32> to vector<2x128xf32>
    %225 = arith.addf %172, %222 : vector<2x32xf32>
    %226 = arith.addf %0, %224 : vector<2x128xf32>
    %cst_48 = arith.constant 5.000000e-01 : f32
    %227 = vector.broadcast %cst_48 : f32 to vector<2x128xf32>
    %228 = arith.mulf %227, %226 : vector<2x128xf32>
    %229 = arith.select %11, %226, %228 : vector<2x128xi1>, vector<2x128xf32>
    %230 = math.tanh %229 : vector<2x128xf32>
    %cst_49 = arith.constant 5.000000e-01 : f32
    %231 = vector.broadcast %cst_49 : f32 to vector<2x128xf32>
    %232 = arith.mulf %231, %230 : vector<2x128xf32>
    %cst_50 = arith.constant 5.000000e-01 : f32
    %233 = vector.broadcast %cst_50 : f32 to vector<2x128xf32>
    %234 = arith.addf %232, %233 : vector<2x128xf32>
    %235 = arith.select %11, %230, %234 : vector<2x128xi1>, vector<2x128xf32>
    %236 = vector.extract_strided_slice %235 {offsets = [0, 0], sizes = [2, 32], strides = [1, 1]} : vector<2x128xf32> to vector<2x32xf32>
    %237 = vector.extract_strided_slice %235 {offsets = [0, 32], sizes = [2, 32], strides = [1, 1]} : vector<2x128xf32> to vector<2x32xf32>
    %238 = vector.extract_strided_slice %235 {offsets = [0, 64], sizes = [2, 32], strides = [1, 1]} : vector<2x128xf32> to vector<2x32xf32>
    %239 = vector.extract_strided_slice %235 {offsets = [0, 96], sizes = [2, 32], strides = [1, 1]} : vector<2x128xf32> to vector<2x32xf32>
    %240 = arith.mulf %237, %189 : vector<2x32xf32>
    %241 = arith.mulf %236, %238 : vector<2x32xf32>
    %242 = arith.addf %240, %241 : vector<2x32xf32>
    %243 = math.tanh %242 : vector<2x32xf32>
    %244 = arith.mulf %239, %243 : vector<2x32xf32>
    %cst_51 = arith.constant 1.000000e+00 : f32
    %245 = vector.broadcast %cst_51 : f32 to vector<2x32xf32>
    %246 = arith.cmpf ogt, %244, %245 : vector<2x32xf32>
    %247 = arith.extui %246 : vector<2x32xi1> to vector<2x32xi32>
    %248 = arith.sitofp %247 : vector<2x32xi32> to vector<2x32xf32>
    %249 = tpu.concatenate %248, %244 in 1 : vector<2x32xf32>, vector<2x32xf32> -> vector<2x64xf32>
    %cst_52 = arith.constant dense<0.000000e+00> : vector<2x256xf32>
    %250 = tpu.matmul %249, %1, %cst_52 {dimension_numbers = #tpu.dot_dimension_numbers<[1], [0], [0], [1], [0, 0, 1, 1], [], []>} : vector<2x64xf32>, vector<64x256xf32>, vector<2x256xf32> -> vector<2x256xf32>
    %251 = vector.extract_strided_slice %250 {offsets = [0, 0], sizes = [2, 128], strides = [1, 1]} : vector<2x256xf32> to vector<2x128xf32>
    %252 = arith.addf %251, %223 : vector<2x128xf32>
    %253 = arith.addf %252, %5 : vector<2x128xf32>
    %cst_53 = arith.constant 5.000000e-01 : f32
    %254 = vector.broadcast %cst_53 : f32 to vector<2x128xf32>
    %255 = arith.mulf %254, %253 : vector<2x128xf32>
    %256 = arith.select %11, %253, %255 : vector<2x128xi1>, vector<2x128xf32>
    %257 = math.tanh %256 : vector<2x128xf32>
    %cst_54 = arith.constant 5.000000e-01 : f32
    %258 = vector.broadcast %cst_54 : f32 to vector<2x128xf32>
    %259 = arith.mulf %258, %257 : vector<2x128xf32>
    %cst_55 = arith.constant 5.000000e-01 : f32
    %260 = vector.broadcast %cst_55 : f32 to vector<2x128xf32>
    %261 = arith.addf %259, %260 : vector<2x128xf32>
    %262 = arith.select %11, %257, %261 : vector<2x128xi1>, vector<2x128xf32>
    %263 = vector.extract_strided_slice %262 {offsets = [0, 0], sizes = [2, 32], strides = [1, 1]} : vector<2x128xf32> to vector<2x32xf32>
    %264 = vector.extract_strided_slice %262 {offsets = [0, 32], sizes = [2, 32], strides = [1, 1]} : vector<2x128xf32> to vector<2x32xf32>
    %265 = vector.extract_strided_slice %262 {offsets = [0, 64], sizes = [2, 32], strides = [1, 1]} : vector<2x128xf32> to vector<2x32xf32>
    %266 = vector.extract_strided_slice %262 {offsets = [0, 96], sizes = [2, 32], strides = [1, 1]} : vector<2x128xf32> to vector<2x32xf32>
    %267 = arith.mulf %264, %216 : vector<2x32xf32>
    %268 = arith.mulf %263, %265 : vector<2x32xf32>
    %269 = arith.addf %267, %268 : vector<2x32xf32>
    %270 = math.tanh %269 : vector<2x32xf32>
    %271 = arith.mulf %266, %270 : vector<2x32xf32>
    %cst_56 = arith.constant 1.000000e+00 : f32
    %272 = vector.broadcast %cst_56 : f32 to vector<2x32xf32>
    %273 = arith.cmpf ogt, %271, %272 : vector<2x32xf32>
    %274 = arith.extui %273 : vector<2x32xi1> to vector<2x32xi32>
    %275 = arith.sitofp %274 : vector<2x32xi32> to vector<2x32xf32>
    %cst_57 = arith.constant dense<0.000000e+00> : vector<2x128xf32>
    %276 = tpu.matmul %271, %2, %cst_57 {dimension_numbers = #tpu.dot_dimension_numbers<[1], [0], [0], [1], [0, 0, 1, 1], [], []>} : vector<2x32xf32>, vector<32x128xf32>, vector<2x128xf32> -> vector<2x128xf32>
    %277 = vector.extract_strided_slice %250 {offsets = [0, 128], sizes = [2, 128], strides = [1, 1]} : vector<2x256xf32> to vector<2x128xf32>
    %278 = arith.addf %225, %275 : vector<2x32xf32>
    %279 = arith.addf %0, %277 : vector<2x128xf32>
    %cst_58 = arith.constant 5.000000e-01 : f32
    %280 = vector.broadcast %cst_58 : f32 to vector<2x128xf32>
    %281 = arith.mulf %280, %279 : vector<2x128xf32>
    %282 = arith.select %11, %279, %281 : vector<2x128xi1>, vector<2x128xf32>
    %283 = math.tanh %282 : vector<2x128xf32>
    %cst_59 = arith.constant 5.000000e-01 : f32
    %284 = vector.broadcast %cst_59 : f32 to vector<2x128xf32>
    %285 = arith.mulf %284, %283 : vector<2x128xf32>
    %cst_60 = arith.constant 5.000000e-01 : f32
    %286 = vector.broadcast %cst_60 : f32 to vector<2x128xf32>
    %287 = arith.addf %285, %286 : vector<2x128xf32>
    %288 = arith.select %11, %283, %287 : vector<2x128xi1>, vector<2x128xf32>
    %289 = vector.extract_strided_slice %288 {offsets = [0, 0], sizes = [2, 32], strides = [1, 1]} : vector<2x128xf32> to vector<2x32xf32>
    %290 = vector.extract_strided_slice %288 {offsets = [0, 32], sizes = [2, 32], strides = [1, 1]} : vector<2x128xf32> to vector<2x32xf32>
    %291 = vector.extract_strided_slice %288 {offsets = [0, 64], sizes = [2, 32], strides = [1, 1]} : vector<2x128xf32> to vector<2x32xf32>
    %292 = vector.extract_strided_slice %288 {offsets = [0, 96], sizes = [2, 32], strides = [1, 1]} : vector<2x128xf32> to vector<2x32xf32>
    %293 = arith.mulf %290, %242 : vector<2x32xf32>
    %294 = arith.mulf %289, %291 : vector<2x32xf32>
    %295 = arith.addf %293, %294 : vector<2x32xf32>
    %296 = math.tanh %295 : vector<2x32xf32>
    %297 = arith.mulf %292, %296 : vector<2x32xf32>
    %cst_61 = arith.constant 1.000000e+00 : f32
    %298 = vector.broadcast %cst_61 : f32 to vector<2x32xf32>
    %299 = arith.cmpf ogt, %297, %298 : vector<2x32xf32>
    %300 = arith.extui %299 : vector<2x32xi1> to vector<2x32xi32>
    %301 = arith.sitofp %300 : vector<2x32xi32> to vector<2x32xf32>
    %302 = tpu.concatenate %301, %297 in 1 : vector<2x32xf32>, vector<2x32xf32> -> vector<2x64xf32>
    %cst_62 = arith.constant dense<0.000000e+00> : vector<2x256xf32>
    %303 = tpu.matmul %302, %1, %cst_62 {dimension_numbers = #tpu.dot_dimension_numbers<[1], [0], [0], [1], [0, 0, 1, 1], [], []>} : vector<2x64xf32>, vector<64x256xf32>, vector<2x256xf32> -> vector<2x256xf32>
    %304 = vector.extract_strided_slice %303 {offsets = [0, 0], sizes = [2, 128], strides = [1, 1]} : vector<2x256xf32> to vector<2x128xf32>
    %305 = arith.addf %304, %276 : vector<2x128xf32>
    %306 = arith.addf %305, %5 : vector<2x128xf32>
    %cst_63 = arith.constant 5.000000e-01 : f32
    %307 = vector.broadcast %cst_63 : f32 to vector<2x128xf32>
    %308 = arith.mulf %307, %306 : vector<2x128xf32>
    %309 = arith.select %11, %306, %308 : vector<2x128xi1>, vector<2x128xf32>
    %310 = math.tanh %309 : vector<2x128xf32>
    %cst_64 = arith.constant 5.000000e-01 : f32
    %311 = vector.broadcast %cst_64 : f32 to vector<2x128xf32>
    %312 = arith.mulf %311, %310 : vector<2x128xf32>
    %cst_65 = arith.constant 5.000000e-01 : f32
    %313 = vector.broadcast %cst_65 : f32 to vector<2x128xf32>
    %314 = arith.addf %312, %313 : vector<2x128xf32>
    %315 = arith.select %11, %310, %314 : vector<2x128xi1>, vector<2x128xf32>
    %316 = vector.extract_strided_slice %315 {offsets = [0, 0], sizes = [2, 32], strides = [1, 1]} : vector<2x128xf32> to vector<2x32xf32>
    %317 = vector.extract_strided_slice %315 {offsets = [0, 32], sizes = [2, 32], strides = [1, 1]} : vector<2x128xf32> to vector<2x32xf32>
    %318 = vector.extract_strided_slice %315 {offsets = [0, 64], sizes = [2, 32], strides = [1, 1]} : vector<2x128xf32> to vector<2x32xf32>
    %319 = vector.extract_strided_slice %315 {offsets = [0, 96], sizes = [2, 32], strides = [1, 1]} : vector<2x128xf32> to vector<2x32xf32>
    %320 = arith.mulf %317, %269 : vector<2x32xf32>
    %321 = arith.mulf %316, %318 : vector<2x32xf32>
    %322 = arith.addf %320, %321 : vector<2x32xf32>
    %323 = math.tanh %322 : vector<2x32xf32>
    %324 = arith.mulf %319, %323 : vector<2x32xf32>
    %cst_66 = arith.constant 1.000000e+00 : f32
    %325 = vector.broadcast %cst_66 : f32 to vector<2x32xf32>
    %326 = arith.cmpf ogt, %324, %325 : vector<2x32xf32>
    %327 = arith.extui %326 : vector<2x32xi1> to vector<2x32xi32>
    %328 = arith.sitofp %327 : vector<2x32xi32> to vector<2x32xf32>
    %cst_67 = arith.constant dense<0.000000e+00> : vector<2x128xf32>
    %329 = tpu.matmul %324, %2, %cst_67 {dimension_numbers = #tpu.dot_dimension_numbers<[1], [0], [0], [1], [0, 0, 1, 1], [], []>} : vector<2x32xf32>, vector<32x128xf32>, vector<2x128xf32> -> vector<2x128xf32>
    %330 = vector.extract_strided_slice %303 {offsets = [0, 128], sizes = [2, 128], strides = [1, 1]} : vector<2x256xf32> to vector<2x128xf32>
    %331 = arith.addf %278, %328 : vector<2x32xf32>
    %332 = arith.addf %0, %330 : vector<2x128xf32>
    %cst_68 = arith.constant 5.000000e-01 : f32
    %333 = vector.broadcast %cst_68 : f32 to vector<2x128xf32>
    %334 = arith.mulf %333, %332 : vector<2x128xf32>
    %335 = arith.select %11, %332, %334 : vector<2x128xi1>, vector<2x128xf32>
    %336 = math.tanh %335 : vector<2x128xf32>
    %cst_69 = arith.constant 5.000000e-01 : f32
    %337 = vector.broadcast %cst_69 : f32 to vector<2x128xf32>
    %338 = arith.mulf %337, %336 : vector<2x128xf32>
    %cst_70 = arith.constant 5.000000e-01 : f32
    %339 = vector.broadcast %cst_70 : f32 to vector<2x128xf32>
    %340 = arith.addf %338, %339 : vector<2x128xf32>
    %341 = arith.select %11, %336, %340 : vector<2x128xi1>, vector<2x128xf32>
    %342 = vector.extract_strided_slice %341 {offsets = [0, 0], sizes = [2, 32], strides = [1, 1]} : vector<2x128xf32> to vector<2x32xf32>
    %343 = vector.extract_strided_slice %341 {offsets = [0, 32], sizes = [2, 32], strides = [1, 1]} : vector<2x128xf32> to vector<2x32xf32>
    %344 = vector.extract_strided_slice %341 {offsets = [0, 64], sizes = [2, 32], strides = [1, 1]} : vector<2x128xf32> to vector<2x32xf32>
    %345 = vector.extract_strided_slice %341 {offsets = [0, 96], sizes = [2, 32], strides = [1, 1]} : vector<2x128xf32> to vector<2x32xf32>
    %346 = arith.mulf %343, %295 : vector<2x32xf32>
    %347 = arith.mulf %342, %344 : vector<2x32xf32>
    %348 = arith.addf %346, %347 : vector<2x32xf32>
    %349 = math.tanh %348 : vector<2x32xf32>
    %350 = arith.mulf %345, %349 : vector<2x32xf32>
    %cst_71 = arith.constant 1.000000e+00 : f32
    %351 = vector.broadcast %cst_71 : f32 to vector<2x32xf32>
    %352 = arith.cmpf ogt, %350, %351 : vector<2x32xf32>
    %353 = arith.extui %352 : vector<2x32xi1> to vector<2x32xi32>
    %354 = arith.sitofp %353 : vector<2x32xi32> to vector<2x32xf32>
    %355 = tpu.concatenate %354, %350 in 1 : vector<2x32xf32>, vector<2x32xf32> -> vector<2x64xf32>
    %cst_72 = arith.constant dense<0.000000e+00> : vector<2x256xf32>
    %356 = tpu.matmul %355, %1, %cst_72 {dimension_numbers = #tpu.dot_dimension_numbers<[1], [0], [0], [1], [0, 0, 1, 1], [], []>} : vector<2x64xf32>, vector<64x256xf32>, vector<2x256xf32> -> vector<2x256xf32>
    %357 = vector.extract_strided_slice %356 {offsets = [0, 0], sizes = [2, 128], strides = [1, 1]} : vector<2x256xf32> to vector<2x128xf32>
    %358 = arith.addf %357, %329 : vector<2x128xf32>
    %359 = arith.addf %358, %5 : vector<2x128xf32>
    %cst_73 = arith.constant 5.000000e-01 : f32
    %360 = vector.broadcast %cst_73 : f32 to vector<2x128xf32>
    %361 = arith.mulf %360, %359 : vector<2x128xf32>
    %362 = arith.select %11, %359, %361 : vector<2x128xi1>, vector<2x128xf32>
    %363 = math.tanh %362 : vector<2x128xf32>
    %cst_74 = arith.constant 5.000000e-01 : f32
    %364 = vector.broadcast %cst_74 : f32 to vector<2x128xf32>
    %365 = arith.mulf %364, %363 : vector<2x128xf32>
    %cst_75 = arith.constant 5.000000e-01 : f32
    %366 = vector.broadcast %cst_75 : f32 to vector<2x128xf32>
    %367 = arith.addf %365, %366 : vector<2x128xf32>
    %368 = arith.select %11, %363, %367 : vector<2x128xi1>, vector<2x128xf32>
    %369 = vector.extract_strided_slice %368 {offsets = [0, 0], sizes = [2, 32], strides = [1, 1]} : vector<2x128xf32> to vector<2x32xf32>
    %370 = vector.extract_strided_slice %368 {offsets = [0, 32], sizes = [2, 32], strides = [1, 1]} : vector<2x128xf32> to vector<2x32xf32>
    %371 = vector.extract_strided_slice %368 {offsets = [0, 64], sizes = [2, 32], strides = [1, 1]} : vector<2x128xf32> to vector<2x32xf32>
    %372 = vector.extract_strided_slice %368 {offsets = [0, 96], sizes = [2, 32], strides = [1, 1]} : vector<2x128xf32> to vector<2x32xf32>
    %373 = arith.mulf %370, %322 : vector<2x32xf32>
    %374 = arith.mulf %369, %371 : vector<2x32xf32>
    %375 = arith.addf %373, %374 : vector<2x32xf32>
    %376 = math.tanh %375 : vector<2x32xf32>
    %377 = arith.mulf %372, %376 : vector<2x32xf32>
    %cst_76 = arith.constant 1.000000e+00 : f32
    %378 = vector.broadcast %cst_76 : f32 to vector<2x32xf32>
    %379 = arith.cmpf ogt, %377, %378 : vector<2x32xf32>
    %380 = arith.extui %379 : vector<2x32xi1> to vector<2x32xi32>
    %381 = arith.sitofp %380 : vector<2x32xi32> to vector<2x32xf32>
    %cst_77 = arith.constant dense<0.000000e+00> : vector<2x128xf32>
    %382 = tpu.matmul %377, %2, %cst_77 {dimension_numbers = #tpu.dot_dimension_numbers<[1], [0], [0], [1], [0, 0, 1, 1], [], []>} : vector<2x32xf32>, vector<32x128xf32>, vector<2x128xf32> -> vector<2x128xf32>
    %383 = vector.extract_strided_slice %356 {offsets = [0, 128], sizes = [2, 128], strides = [1, 1]} : vector<2x256xf32> to vector<2x128xf32>
    %384 = arith.addf %331, %381 : vector<2x32xf32>
    %385 = arith.addf %0, %383 : vector<2x128xf32>
    %cst_78 = arith.constant 5.000000e-01 : f32
    %386 = vector.broadcast %cst_78 : f32 to vector<2x128xf32>
    %387 = arith.mulf %386, %385 : vector<2x128xf32>
    %388 = arith.select %11, %385, %387 : vector<2x128xi1>, vector<2x128xf32>
    %389 = math.tanh %388 : vector<2x128xf32>
    %cst_79 = arith.constant 5.000000e-01 : f32
    %390 = vector.broadcast %cst_79 : f32 to vector<2x128xf32>
    %391 = arith.mulf %390, %389 : vector<2x128xf32>
    %cst_80 = arith.constant 5.000000e-01 : f32
    %392 = vector.broadcast %cst_80 : f32 to vector<2x128xf32>
    %393 = arith.addf %391, %392 : vector<2x128xf32>
    %394 = arith.select %11, %389, %393 : vector<2x128xi1>, vector<2x128xf32>
    %395 = vector.extract_strided_slice %394 {offsets = [0, 0], sizes = [2, 32], strides = [1, 1]} : vector<2x128xf32> to vector<2x32xf32>
    %396 = vector.extract_strided_slice %394 {offsets = [0, 32], sizes = [2, 32], strides = [1, 1]} : vector<2x128xf32> to vector<2x32xf32>
    %397 = vector.extract_strided_slice %394 {offsets = [0, 64], sizes = [2, 32], strides = [1, 1]} : vector<2x128xf32> to vector<2x32xf32>
    %398 = vector.extract_strided_slice %394 {offsets = [0, 96], sizes = [2, 32], strides = [1, 1]} : vector<2x128xf32> to vector<2x32xf32>
    %399 = arith.mulf %396, %348 : vector<2x32xf32>
    %400 = arith.mulf %395, %397 : vector<2x32xf32>
    %401 = arith.addf %399, %400 : vector<2x32xf32>
    %402 = math.tanh %401 : vector<2x32xf32>
    %403 = arith.mulf %398, %402 : vector<2x32xf32>
    %cst_81 = arith.constant 1.000000e+00 : f32
    %404 = vector.broadcast %cst_81 : f32 to vector<2x32xf32>
    %405 = arith.cmpf ogt, %403, %404 : vector<2x32xf32>
    %406 = arith.extui %405 : vector<2x32xi1> to vector<2x32xi32>
    %407 = arith.sitofp %406 : vector<2x32xi32> to vector<2x32xf32>
    %408 = tpu.concatenate %407, %403 in 1 : vector<2x32xf32>, vector<2x32xf32> -> vector<2x64xf32>
    %cst_82 = arith.constant dense<0.000000e+00> : vector<2x256xf32>
    %409 = tpu.matmul %408, %1, %cst_82 {dimension_numbers = #tpu.dot_dimension_numbers<[1], [0], [0], [1], [0, 0, 1, 1], [], []>} : vector<2x64xf32>, vector<64x256xf32>, vector<2x256xf32> -> vector<2x256xf32>
    %410 = vector.extract_strided_slice %409 {offsets = [0, 0], sizes = [2, 128], strides = [1, 1]} : vector<2x256xf32> to vector<2x128xf32>
    %411 = arith.addf %410, %382 : vector<2x128xf32>
    %412 = arith.addf %411, %5 : vector<2x128xf32>
    %cst_83 = arith.constant 5.000000e-01 : f32
    %413 = vector.broadcast %cst_83 : f32 to vector<2x128xf32>
    %414 = arith.mulf %413, %412 : vector<2x128xf32>
    %415 = arith.select %11, %412, %414 : vector<2x128xi1>, vector<2x128xf32>
    %416 = math.tanh %415 : vector<2x128xf32>
    %cst_84 = arith.constant 5.000000e-01 : f32
    %417 = vector.broadcast %cst_84 : f32 to vector<2x128xf32>
    %418 = arith.mulf %417, %416 : vector<2x128xf32>
    %cst_85 = arith.constant 5.000000e-01 : f32
    %419 = vector.broadcast %cst_85 : f32 to vector<2x128xf32>
    %420 = arith.addf %418, %419 : vector<2x128xf32>
    %421 = arith.select %11, %416, %420 : vector<2x128xi1>, vector<2x128xf32>
    %422 = vector.extract_strided_slice %421 {offsets = [0, 0], sizes = [2, 32], strides = [1, 1]} : vector<2x128xf32> to vector<2x32xf32>
    %423 = vector.extract_strided_slice %421 {offsets = [0, 32], sizes = [2, 32], strides = [1, 1]} : vector<2x128xf32> to vector<2x32xf32>
    %424 = vector.extract_strided_slice %421 {offsets = [0, 64], sizes = [2, 32], strides = [1, 1]} : vector<2x128xf32> to vector<2x32xf32>
    %425 = vector.extract_strided_slice %421 {offsets = [0, 96], sizes = [2, 32], strides = [1, 1]} : vector<2x128xf32> to vector<2x32xf32>
    %426 = arith.mulf %423, %375 : vector<2x32xf32>
    %427 = arith.mulf %422, %424 : vector<2x32xf32>
    %428 = arith.addf %426, %427 : vector<2x32xf32>
    %429 = math.tanh %428 : vector<2x32xf32>
    %430 = arith.mulf %425, %429 : vector<2x32xf32>
    %cst_86 = arith.constant 1.000000e+00 : f32
    %431 = vector.broadcast %cst_86 : f32 to vector<2x32xf32>
    %432 = arith.cmpf ogt, %430, %431 : vector<2x32xf32>
    %433 = arith.extui %432 : vector<2x32xi1> to vector<2x32xi32>
    %434 = arith.sitofp %433 : vector<2x32xi32> to vector<2x32xf32>
    %cst_87 = arith.constant dense<0.000000e+00> : vector<2x128xf32>
    %435 = tpu.matmul %430, %2, %cst_87 {dimension_numbers = #tpu.dot_dimension_numbers<[1], [0], [0], [1], [0, 0, 1, 1], [], []>} : vector<2x32xf32>, vector<32x128xf32>, vector<2x128xf32> -> vector<2x128xf32>
    %436 = vector.extract_strided_slice %409 {offsets = [0, 128], sizes = [2, 128], strides = [1, 1]} : vector<2x256xf32> to vector<2x128xf32>
    %437 = arith.addf %384, %434 : vector<2x32xf32>
    %438 = arith.addf %0, %436 : vector<2x128xf32>
    %cst_88 = arith.constant 5.000000e-01 : f32
    %439 = vector.broadcast %cst_88 : f32 to vector<2x128xf32>
    %440 = arith.mulf %439, %438 : vector<2x128xf32>
    %441 = arith.select %11, %438, %440 : vector<2x128xi1>, vector<2x128xf32>
    %442 = math.tanh %441 : vector<2x128xf32>
    %cst_89 = arith.constant 5.000000e-01 : f32
    %443 = vector.broadcast %cst_89 : f32 to vector<2x128xf32>
    %444 = arith.mulf %443, %442 : vector<2x128xf32>
    %cst_90 = arith.constant 5.000000e-01 : f32
    %445 = vector.broadcast %cst_90 : f32 to vector<2x128xf32>
    %446 = arith.addf %444, %445 : vector<2x128xf32>
    %447 = arith.select %11, %442, %446 : vector<2x128xi1>, vector<2x128xf32>
    %448 = vector.extract_strided_slice %447 {offsets = [0, 0], sizes = [2, 32], strides = [1, 1]} : vector<2x128xf32> to vector<2x32xf32>
    %449 = vector.extract_strided_slice %447 {offsets = [0, 32], sizes = [2, 32], strides = [1, 1]} : vector<2x128xf32> to vector<2x32xf32>
    %450 = vector.extract_strided_slice %447 {offsets = [0, 64], sizes = [2, 32], strides = [1, 1]} : vector<2x128xf32> to vector<2x32xf32>
    %451 = vector.extract_strided_slice %447 {offsets = [0, 96], sizes = [2, 32], strides = [1, 1]} : vector<2x128xf32> to vector<2x32xf32>
    %452 = arith.mulf %449, %401 : vector<2x32xf32>
    %453 = arith.mulf %448, %450 : vector<2x32xf32>
    %454 = arith.addf %452, %453 : vector<2x32xf32>
    %455 = math.tanh %454 : vector<2x32xf32>
    %456 = arith.mulf %451, %455 : vector<2x32xf32>
    %cst_91 = arith.constant 1.000000e+00 : f32
    %457 = vector.broadcast %cst_91 : f32 to vector<2x32xf32>
    %458 = arith.cmpf ogt, %456, %457 : vector<2x32xf32>
    %459 = arith.extui %458 : vector<2x32xi1> to vector<2x32xi32>
    %460 = arith.sitofp %459 : vector<2x32xi32> to vector<2x32xf32>
    %461 = tpu.concatenate %460, %456 in 1 : vector<2x32xf32>, vector<2x32xf32> -> vector<2x64xf32>
    %cst_92 = arith.constant dense<0.000000e+00> : vector<2x256xf32>
    %462 = tpu.matmul %461, %1, %cst_92 {dimension_numbers = #tpu.dot_dimension_numbers<[1], [0], [0], [1], [0, 0, 1, 1], [], []>} : vector<2x64xf32>, vector<64x256xf32>, vector<2x256xf32> -> vector<2x256xf32>
    %463 = vector.extract_strided_slice %462 {offsets = [0, 0], sizes = [2, 128], strides = [1, 1]} : vector<2x256xf32> to vector<2x128xf32>
    %464 = arith.addf %463, %435 : vector<2x128xf32>
    %465 = arith.addf %464, %5 : vector<2x128xf32>
    %cst_93 = arith.constant 5.000000e-01 : f32
    %466 = vector.broadcast %cst_93 : f32 to vector<2x128xf32>
    %467 = arith.mulf %466, %465 : vector<2x128xf32>
    %468 = arith.select %11, %465, %467 : vector<2x128xi1>, vector<2x128xf32>
    %469 = math.tanh %468 : vector<2x128xf32>
    %cst_94 = arith.constant 5.000000e-01 : f32
    %470 = vector.broadcast %cst_94 : f32 to vector<2x128xf32>
    %471 = arith.mulf %470, %469 : vector<2x128xf32>
    %cst_95 = arith.constant 5.000000e-01 : f32
    %472 = vector.broadcast %cst_95 : f32 to vector<2x128xf32>
    %473 = arith.addf %471, %472 : vector<2x128xf32>
    %474 = arith.select %11, %469, %473 : vector<2x128xi1>, vector<2x128xf32>
    %475 = vector.extract_strided_slice %474 {offsets = [0, 0], sizes = [2, 32], strides = [1, 1]} : vector<2x128xf32> to vector<2x32xf32>
    %476 = vector.extract_strided_slice %474 {offsets = [0, 32], sizes = [2, 32], strides = [1, 1]} : vector<2x128xf32> to vector<2x32xf32>
    %477 = vector.extract_strided_slice %474 {offsets = [0, 64], sizes = [2, 32], strides = [1, 1]} : vector<2x128xf32> to vector<2x32xf32>
    %478 = vector.extract_strided_slice %474 {offsets = [0, 96], sizes = [2, 32], strides = [1, 1]} : vector<2x128xf32> to vector<2x32xf32>
    %479 = arith.mulf %476, %428 : vector<2x32xf32>
    %480 = arith.mulf %475, %477 : vector<2x32xf32>
    %481 = arith.addf %479, %480 : vector<2x32xf32>
    %482 = math.tanh %481 : vector<2x32xf32>
    %483 = arith.mulf %478, %482 : vector<2x32xf32>
    %cst_96 = arith.constant 1.000000e+00 : f32
    %484 = vector.broadcast %cst_96 : f32 to vector<2x32xf32>
    %485 = arith.cmpf ogt, %483, %484 : vector<2x32xf32>
    %486 = arith.extui %485 : vector<2x32xi1> to vector<2x32xi32>
    %487 = arith.sitofp %486 : vector<2x32xi32> to vector<2x32xf32>
    %cst_97 = arith.constant dense<0.000000e+00> : vector<2x128xf32>
    %488 = tpu.matmul %483, %2, %cst_97 {dimension_numbers = #tpu.dot_dimension_numbers<[1], [0], [0], [1], [0, 0, 1, 1], [], []>} : vector<2x32xf32>, vector<32x128xf32>, vector<2x128xf32> -> vector<2x128xf32>
    %489 = vector.extract_strided_slice %462 {offsets = [0, 128], sizes = [2, 128], strides = [1, 1]} : vector<2x256xf32> to vector<2x128xf32>
    %490 = arith.addf %437, %487 : vector<2x32xf32>
    %491 = arith.addf %0, %489 : vector<2x128xf32>
    %cst_98 = arith.constant 5.000000e-01 : f32
    %492 = vector.broadcast %cst_98 : f32 to vector<2x128xf32>
    %493 = arith.mulf %492, %491 : vector<2x128xf32>
    %494 = arith.select %11, %491, %493 : vector<2x128xi1>, vector<2x128xf32>
    %495 = math.tanh %494 : vector<2x128xf32>
    %cst_99 = arith.constant 5.000000e-01 : f32
    %496 = vector.broadcast %cst_99 : f32 to vector<2x128xf32>
    %497 = arith.mulf %496, %495 : vector<2x128xf32>
    %cst_100 = arith.constant 5.000000e-01 : f32
    %498 = vector.broadcast %cst_100 : f32 to vector<2x128xf32>
    %499 = arith.addf %497, %498 : vector<2x128xf32>
    %500 = arith.select %11, %495, %499 : vector<2x128xi1>, vector<2x128xf32>
    %501 = vector.extract_strided_slice %500 {offsets = [0, 0], sizes = [2, 32], strides = [1, 1]} : vector<2x128xf32> to vector<2x32xf32>
    %502 = vector.extract_strided_slice %500 {offsets = [0, 32], sizes = [2, 32], strides = [1, 1]} : vector<2x128xf32> to vector<2x32xf32>
    %503 = vector.extract_strided_slice %500 {offsets = [0, 64], sizes = [2, 32], strides = [1, 1]} : vector<2x128xf32> to vector<2x32xf32>
    %504 = vector.extract_strided_slice %500 {offsets = [0, 96], sizes = [2, 32], strides = [1, 1]} : vector<2x128xf32> to vector<2x32xf32>
    %505 = arith.mulf %502, %454 : vector<2x32xf32>
    %506 = arith.mulf %501, %503 : vector<2x32xf32>
    %507 = arith.addf %505, %506 : vector<2x32xf32>
    %508 = math.tanh %507 : vector<2x32xf32>
    %509 = arith.mulf %504, %508 : vector<2x32xf32>
    %cst_101 = arith.constant 1.000000e+00 : f32
    %510 = vector.broadcast %cst_101 : f32 to vector<2x32xf32>
    %511 = arith.cmpf ogt, %509, %510 : vector<2x32xf32>
    %512 = arith.extui %511 : vector<2x32xi1> to vector<2x32xi32>
    %513 = arith.sitofp %512 : vector<2x32xi32> to vector<2x32xf32>
    %514 = tpu.concatenate %513, %509 in 1 : vector<2x32xf32>, vector<2x32xf32> -> vector<2x64xf32>
    %cst_102 = arith.constant dense<0.000000e+00> : vector<2x256xf32>
    %515 = tpu.matmul %514, %1, %cst_102 {dimension_numbers = #tpu.dot_dimension_numbers<[1], [0], [0], [1], [0, 0, 1, 1], [], []>} : vector<2x64xf32>, vector<64x256xf32>, vector<2x256xf32> -> vector<2x256xf32>
    %516 = vector.extract_strided_slice %515 {offsets = [0, 0], sizes = [2, 128], strides = [1, 1]} : vector<2x256xf32> to vector<2x128xf32>
    %517 = arith.addf %516, %488 : vector<2x128xf32>
    %518 = arith.addf %517, %5 : vector<2x128xf32>
    %cst_103 = arith.constant 5.000000e-01 : f32
    %519 = vector.broadcast %cst_103 : f32 to vector<2x128xf32>
    %520 = arith.mulf %519, %518 : vector<2x128xf32>
    %521 = arith.select %11, %518, %520 : vector<2x128xi1>, vector<2x128xf32>
    %522 = math.tanh %521 : vector<2x128xf32>
    %cst_104 = arith.constant 5.000000e-01 : f32
    %523 = vector.broadcast %cst_104 : f32 to vector<2x128xf32>
    %524 = arith.mulf %523, %522 : vector<2x128xf32>
    %cst_105 = arith.constant 5.000000e-01 : f32
    %525 = vector.broadcast %cst_105 : f32 to vector<2x128xf32>
    %526 = arith.addf %524, %525 : vector<2x128xf32>
    %527 = arith.select %11, %522, %526 : vector<2x128xi1>, vector<2x128xf32>
    %528 = vector.extract_strided_slice %527 {offsets = [0, 0], sizes = [2, 32], strides = [1, 1]} : vector<2x128xf32> to vector<2x32xf32>
    %529 = vector.extract_strided_slice %527 {offsets = [0, 32], sizes = [2, 32], strides = [1, 1]} : vector<2x128xf32> to vector<2x32xf32>
    %530 = vector.extract_strided_slice %527 {offsets = [0, 64], sizes = [2, 32], strides = [1, 1]} : vector<2x128xf32> to vector<2x32xf32>
    %531 = vector.extract_strided_slice %527 {offsets = [0, 96], sizes = [2, 32], strides = [1, 1]} : vector<2x128xf32> to vector<2x32xf32>
    %532 = arith.mulf %529, %481 : vector<2x32xf32>
    %533 = arith.mulf %528, %530 : vector<2x32xf32>
    %534 = arith.addf %532, %533 : vector<2x32xf32>
    %535 = math.tanh %534 : vector<2x32xf32>
    %536 = arith.mulf %531, %535 : vector<2x32xf32>
    %cst_106 = arith.constant 1.000000e+00 : f32
    %537 = vector.broadcast %cst_106 : f32 to vector<2x32xf32>
    %538 = arith.cmpf ogt, %536, %537 : vector<2x32xf32>
    %539 = arith.extui %538 : vector<2x32xi1> to vector<2x32xi32>
    %540 = arith.sitofp %539 : vector<2x32xi32> to vector<2x32xf32>
    %541 = arith.addf %490, %540 : vector<2x32xf32>
    %cst_107 = arith.constant 1.000000e-01 : f32
    %542 = vector.broadcast %cst_107 : f32 to vector<2x32xf32>
    %543 = arith.mulf %541, %542 : vector<2x32xf32>
    %c0_108 = arith.constant 0 : index
    %c0_109 = arith.constant 0 : index
    %544 = vector.load %arg4[%c0_108, %c0_109] : memref<2x32xf32, #tpu.memory_space<vmem>>, vector<2x32xf32>
    tpu.vector_store %arg4[%c0_108, %c0_109], %543 {strides = array<i32>} : memref<2x32xf32, #tpu.memory_space<vmem>>, vector<2x32xf32>,
    return
  }
}

</mosaic_0001>

<llo_original>
// kernel: tpu_custom_call.1
$region0: #{tpu_custom_call.1}
  #allocation0 [shape = 'u32[]', space=smem, size = 0x4, offset = 0x4, fixed_abs, tag = 'smem constant byte address 0x4 - core index']
  #allocation1 [shape = 'u32[144,128]{1,0:T(1,128)}', space=vmem, size = 0x12000, scoped, tag = 'internal scratch']
  %s0 = inlined_call_operand.hbm [shape: f32[2,128], index: 0, kind: input, shape index: {}]
  %s1 = inlined_call_operand.hbm [shape: f32[64,256], index: 1, kind: input, shape index: {}]
  %s2 = inlined_call_operand.hbm [shape: f32[32,128], index: 2, kind: input, shape index: {}]
  %s3 = inlined_call_operand.vmem [shape: f32[1,128], index: 3, kind: input, shape index: {}]
  %s4 = inlined_call_operand.hbm [shape: f32[2,32], index: 4, kind: output, shape index: {}]
  %s5 = sld [smem:[#allocation0]]
  $region38: #{tpu_custom_call.1} parent=0
    _
  %s7 = ssub.s32 1, %s5
  %s8 = scalar_select 0, %s7, %s5
  $region1: #{tpu_custom_call.1} parent=0
    #allocation2 [shape = 'u8[1024]{0}', space=vmem, size = 0x400, scoped, tag = 'input window, operand 0, single buffered']
    #allocation3 [shape = 's32[1]{0}', space=sflag, size = 0x4, scoped, tag = 'scoped memory for tpu_custom_call.1']
    #allocation4 [shape = 's32[1]{0}', space=sflag, size = 0x4, scoped, tag = 'scoped memory for tpu_custom_call.1']
    #allocation5 [shape = 'u8[65536]{0}', space=vmem, size = 0x10000, scoped, tag = 'input window, operand 1, single buffered']
    #allocation6 [shape = 's32[1]{0}', space=sflag, size = 0x4, scoped, tag = 'scoped memory for tpu_custom_call.1']
    #allocation7 [shape = 'u8[16384]{0}', space=vmem, size = 0x4000, scoped, tag = 'input window, operand 2, single buffered']
    #allocation8 [shape = 'u8[1024]{0}', space=vmem, size = 0x400, scoped, tag = 'output window, operand 0, single buffered']
    %9 = vsyncpa [#allocation3], 0
    %10 = vsyncpa [#allocation6], 0
    %11 = vsyncpa [#allocation4], 0
    // Predicated region
    $region2: #{tpu_custom_call.1} parent=1 // pred_check
      _
    $region3: #{tpu_custom_call.1} parent=1 // pred_check_branch
      %13 = sbr.rel (0) target = $region5
    $region4: #{tpu_custom_call.1} parent=1 // pred_region
      %s15 = ssub.s32 32, 32
      %16 = vsyncadd [#allocation3], %s15
      %s18 = sshll.u32 [#allocation2], 4
      %s19 = int_to_ptr.vmem [resolvable:$true] %s18
      %21 = dma.hbm_to_vmem [thread:$0]  %s0, 32, %s19, [#allocation3]
    $region5: #{tpu_custom_call.1} parent=1 // pred_fallthru
      _
    // Predicated region
    $region6: #{tpu_custom_call.1} parent=1 // pred_check
      _
    $region7: #{tpu_custom_call.1} parent=1 // pred_check_branch
      %23 = sbr.rel (0) target = $region9
    $region8: #{tpu_custom_call.1} parent=1 // pred_region
      %s25 = ssub.s32 2048, 2048
      %26 = vsyncadd [#allocation6], %s25
      %s27 = sshll.u32 [#allocation5], 4
      %s28 = int_to_ptr.vmem [resolvable:$true] %s27
      %33 = dma.hbm_to_vmem [thread:$0]  %s1, 2048, %s28, [#allocation6], 256, 256, 16
    $region9: #{tpu_custom_call.1} parent=1 // pred_fallthru
      _
    // Predicated region
    $region10: #{tpu_custom_call.1} parent=1 // pred_check
      _
    $region11: #{tpu_custom_call.1} parent=1 // pred_check_branch
      %35 = sbr.rel (0) target = $region13
    $region12: #{tpu_custom_call.1} parent=1 // pred_region
      %s37 = ssub.s32 512, 512
      %38 = vsyncadd [#allocation6], %s37
      %s39 = sshll.u32 [#allocation7], 4
      %s40 = int_to_ptr.vmem [resolvable:$true] %s39
      %45 = dma.hbm_to_vmem [thread:$0]  %s2, 512, %s40, [#allocation6], 128, 128, 8
    $region13: #{tpu_custom_call.1} parent=1 // pred_fallthru
      _
    // Predicated region
    $region14: #{tpu_custom_call.1} parent=1 // pred_check
      _
    $region15: #{tpu_custom_call.1} parent=1 // pred_check_branch
      %47 = sbr.rel (0) target = $region17
    $region16: #{tpu_custom_call.1} parent=1 // pred_region
      _
    $region17: #{tpu_custom_call.1} parent=1 // pred_fallthru
      _
    // Predicated region
    $region18: #{tpu_custom_call.1} parent=1 // pred_check
      _
    $region19: #{tpu_custom_call.1} parent=1 // pred_check_branch
      %49 = sbr.rel (0) target = $region21
    $region20: #{tpu_custom_call.1} parent=1 // pred_region
      %50 = dma.done [#allocation3], 32
    $region21: #{tpu_custom_call.1} parent=1 // pred_fallthru
      _
    // Predicated region
    $region22: #{tpu_custom_call.1} parent=1 // pred_check
      _
    $region23: #{tpu_custom_call.1} parent=1 // pred_check_branch
      %52 = sbr.rel (0) target = $region25
    $region24: #{tpu_custom_call.1} parent=1 // pred_region
      %53 = dma.done [#allocation6], 2048
    $region25: #{tpu_custom_call.1} parent=1 // pred_fallthru
      _
    // Predicated region
    $region26: #{tpu_custom_call.1} parent=1 // pred_check
      _
    $region27: #{tpu_custom_call.1} parent=1 // pred_check_branch
      %55 = sbr.rel (0) target = $region29
    $region28: #{tpu_custom_call.1} parent=1 // pred_region
      %56 = dma.done [#allocation6], 512
    $region29: #{tpu_custom_call.1} parent=1 // pred_fallthru
      _
    %v57 = vld [vmem:[#allocation2] sm:$0x3]
    %v58 = vld [vmem:[#allocation5] sm:$0xff]
    %v59 = vld [vmem:[#allocation5 + $0x8] sm:$0xff]
    %v60 = vld [vmem:[#allocation5 + $0x10] sm:$0xff]
    %v61 = vld [vmem:[#allocation5 + $0x18] sm:$0xff]
    %v62 = vld [vmem:[#allocation5 + $0x20] sm:$0xff]
    %v63 = vld [vmem:[#allocation5 + $0x28] sm:$0xff]
    %v64 = vld [vmem:[#allocation5 + $0x30] sm:$0xff]
    %v65 = vld [vmem:[#allocation5 + $0x38] sm:$0xff]
    %v66 = vld [vmem:[#allocation5 + $0x40] sm:$0xff]
    %v67 = vld [vmem:[#allocation5 + $0x48] sm:$0xff]
    %v68 = vld [vmem:[#allocation5 + $0x50] sm:$0xff]
    %v69 = vld [vmem:[#allocation5 + $0x58] sm:$0xff]
    %v70 = vld [vmem:[#allocation5 + $0x60] sm:$0xff]
    %v71 = vld [vmem:[#allocation5 + $0x68] sm:$0xff]
    %v72 = vld [vmem:[#allocation5 + $0x70] sm:$0xff]
    %v73 = vld [vmem:[#allocation5 + $0x78] sm:$0xff]
    %v74 = vld [vmem:[#allocation7] sm:$0xff]
    %v75 = vld [vmem:[#allocation7 + $0x8] sm:$0xff]
    %v76 = vld [vmem:[#allocation7 + $0x10] sm:$0xff]
    %v77 = vld [vmem:[#allocation7 + $0x18] sm:$0xff]
    %v78 = vld [vmem:[%s3] sm:$0x1]
    %v80 = vlaneseq
    %v81 = vshrl.u32 %v80, 7
    %v82 = vsub.s32 0, %v81
    %v83 = vrot.slane %v78, %v82
    %v85 = vlaneseq
    %v86 = vand.u32 %v85, 127
    %vm87 = vcmp.ge.s32.totalorder %v86, 64
    %vm88 = vcmp.lt.s32.totalorder %v86, 96
    %vm89 = vmand %vm87, %vm88
    %v90 = vadd.f32 %v57, 0.0
    %v91 = vmul.f32 %v90, 0.5
    %v92 = vsel %vm89, %v90, %v91
    %v93 = vtanh.pop %v92
    %v94 = vmul.f32 %v93, 0.5
    %v95 = vadd.f32 %v94, 0.5
    %v96 = vsel %vm89, %v93, %v95
    %v97 = vmul.f32 %v96, 0.0
    %99 = vrot.lane.b32.xlu0 %v96, 64
    %v100 = vpop.permute.xlu0 %99
    %v102 = vmul.f32 %v96, %v100
    %104 = vrot.lane.b32.xlu0 %v102, 32
    %v105 = vpop.permute.xlu0 %104
    %v107 = vadd.f32 %v97, %v105
    %v108 = vtanh.pop %v107
    %110 = vrot.lane.b32.xlu0 %v108, 64
    %v111 = vpop.permute.xlu0 %110
    %v113 = vmul.f32 %v96, %v111
    %vm114 = vcmp.gt.f32.partialorder %v113, 1.0
    %v115 = vsel %vm114, 1, 0
    %v116 = vcvt.s32.f32 %v115
    %118 = vrot.lane.b32.xlu0 %v116, 32
    %v119 = vpop.permute.xlu0 %118
    %122 = vrot.lane.b32.xlu0 %v113, 64
    %v123 = vpop.permute.xlu0 %122
    %vm125 = vcmask 261120
    %v126 = vsel %vm125, %v119, %v123
    %vm127 = vcmask 523264
    %v129 = vsel %vm127, %v126, 0
    %131 = vmatprep.subr.mxu0 %v59
    %132 = vmatpush1.msra.mxu0 %v58
    %133 = vmatprep.subr.mxu0 %v61
    %134 = vmatpush1.msra.mxu0 %v60
    %135 = vmatprep.subr.mxu0 %v63
    %136 = vmatpush1.msra.mxu0 %v62
    %137 = vmatprep.subr.mxu0 %v65
    %138 = vmatpush1.msra.mxu0 %v64
    %139 = vmatprep.subr.mxu0 %v67
    %140 = vmatpush1.msra.mxu0 %v66
    %141 = vmatprep.subr.mxu0 %v69
    %142 = vmatpush1.msra.mxu0 %v68
    %143 = vmatprep.subr.mxu0 %v71
    %144 = vmatpush1.msra.mxu0 %v70
    %145 = vmatprep.subr.mxu0 %v73
    %146 = vmatpush1.msra.mxu0 %v72
    %147 = vmatprep.subr.mxu0 0.0
    %148 = vmatpush1.msra.mxu0 0.0
    %149 = vmatprep.subr.mxu0 0.0
    %150 = vmatpush1.msra.mxu0 0.0
    %151 = vmatprep.subr.mxu0 0.0
    %152 = vmatpush1.msra.mxu0 0.0
    %153 = vmatprep.subr.mxu0 0.0
    %154 = vmatpush1.msra.mxu0 0.0
    %155 = vmatprep.subr.mxu0 0.0
    %156 = vmatpush1.msra.mxu0 0.0
    %157 = vmatprep.subr.mxu0 0.0
    %158 = vmatpush1.msra.mxu0 0.0
    %159 = vmatprep.subr.mxu0 0.0
    %160 = vmatpush1.msra.mxu0 0.0
    %161 = vmatprep.subr.mxu0 0.0
    %162 = vmatpush1.msra.mxu0 0.0
    %163 = vmatprep.subr.mxu0 0.0
    %164 = vmatpush1.msra.mxu0 0.0
    %165 = vmatprep.subr.mxu0 0.0
    %166 = vmatpush1.msra.mxu0 0.0
    %167 = vmatprep.subr.mxu0 0.0
    %168 = vmatpush1.msra.mxu0 0.0
    %169 = vmatprep.subr.mxu0 0.0
    %170 = vmatpush1.msra.mxu0 0.0
    %171 = vmatprep.subr.mxu0 0.0
    %172 = vmatpush1.msra.mxu0 0.0
    %173 = vmatprep.subr.mxu0 0.0
    %174 = vmatpush1.msra.mxu0 0.0
    %175 = vmatprep.subr.mxu0 0.0
    %176 = vmatpush1.msra.mxu0 0.0
    %177 = vmatprep.subr.mxu0 0.0
    %178 = vmatpush1.msra.mxu0 0.0
    %179 = vmatprep.subr.mxu0 0.0
    %180 = vmatpush1.msra.mxu0 0.0
    %181 = vmatprep.subr.mxu0 0.0
    %182 = vmatpush1.msra.mxu0 0.0
    %183 = vmatprep.subr.mxu0 0.0
    %184 = vmatpush1.msra.mxu0 0.0
    %185 = vmatprep.subr.mxu0 0.0
    %186 = vmatpush1.msra.mxu0 0.0
    %187 = vmatprep.subr.mxu0 0.0
    %188 = vmatpush1.msra.mxu0 0.0
    %189 = vmatprep.subr.mxu0 0.0
    %190 = vmatpush1.msra.mxu0 0.0
    %191 = vmatprep.subr.mxu0 0.0
    %192 = vmatpush1.msra.mxu0 0.0
    %193 = vmatprep.subr.mxu0 0.0
    %194 = vmatpush1.msra.mxu0 0.0
    %195 = vmatprep.mubr.f32.mxu0 0.0
    %196 = vmatmul.mubr.f32.gmra.mrb[0].mxu0 %v129
    %v197 = vpop.f32.mrb[0].mxu0
    %v198 = vadd.f32 0.0, %v197
    %v199 = vpop.f32.mrb[0].mxu0
    %v200 = vadd.f32 0.0, %v199
    %201 = vdwg.mxu0
    %v202 = vadd.f32 %v198, 0.0
    %v203 = vadd.f32 %v202, %v83
    %v204 = vmul.f32 %v203, 0.5
    %v205 = vsel %vm89, %v203, %v204
    %v206 = vtanh.pop %v205
    %v207 = vmul.f32 %v206, 0.5
    %v208 = vadd.f32 %v207, 0.5
    %v209 = vsel %vm89, %v206, %v208
    %v210 = vmul.f32 %v209, 0.0
    %212 = vrot.lane.b32.xlu0 %v209, 64
    %v213 = vpop.permute.xlu0 %212
    %v215 = vmul.f32 %v209, %v213
    %217 = vrot.lane.b32.xlu0 %v215, 32
    %v218 = vpop.permute.xlu0 %217
    %v220 = vadd.f32 %v210, %v218
    %v221 = vtanh.pop %v220
    %223 = vrot.lane.b32.xlu0 %v221, 64
    %v224 = vpop.permute.xlu0 %223
    %v226 = vmul.f32 %v209, %v224
    %vm227 = vcmp.gt.f32.partialorder %v226, 1.0
    %v228 = vsel %vm227, 1, 0
    %v229 = vcvt.s32.f32 %v228
    %231 = vrot.lane.b32.xlu0 %v226, 32
    %v232 = vpop.permute.xlu0 %231
    %v233 = vsel %vm125, %v232, 0
    %235 = vmatprep.subr.mxu0 0.0
    %236 = vmatpush1.msra.mxu0 %v74
    %237 = vmatprep.subr.mxu0 0.0
    %238 = vmatpush1.msra.mxu0 %v75
    %239 = vmatprep.subr.mxu0 0.0
    %240 = vmatpush1.msra.mxu0 %v76
    %241 = vmatprep.subr.mxu0 0.0
    %242 = vmatpush1.msra.mxu0 %v77
    %243 = vmatprep.subr.mxu0 0.0
    %244 = vmatpush1.msra.mxu0 0.0
    %245 = vmatprep.subr.mxu0 0.0
    %246 = vmatpush1.msra.mxu0 0.0
    %247 = vmatprep.subr.mxu0 0.0
    %248 = vmatpush1.msra.mxu0 0.0
    %249 = vmatprep.subr.mxu0 0.0
    %250 = vmatpush1.msra.mxu0 0.0
    %251 = vmatprep.subr.mxu0 0.0
    %252 = vmatpush1.msra.mxu0 0.0
    %253 = vmatprep.subr.mxu0 0.0
    %254 = vmatpush1.msra.mxu0 0.0
    %255 = vmatprep.subr.mxu0 0.0
    %256 = vmatpush1.msra.mxu0 0.0
    %257 = vmatprep.subr.mxu0 0.0
    %258 = vmatpush1.msra.mxu0 0.0
    %259 = vmatprep.subr.mxu0 0.0
    %260 = vmatpush1.msra.mxu0 0.0
    %261 = vmatprep.subr.mxu0 0.0
    %262 = vmatpush1.msra.mxu0 0.0
    %263 = vmatprep.subr.mxu0 0.0
    %264 = vmatpush1.msra.mxu0 0.0
    %265 = vmatprep.subr.mxu0 0.0
    %266 = vmatpush1.msra.mxu0 0.0
    %267 = vmatprep.subr.mxu0 0.0
    %268 = vmatpush1.msra.mxu0 0.0
    %269 = vmatprep.subr.mxu0 0.0
    %270 = vmatpush1.msra.mxu0 0.0
    %271 = vmatprep.subr.mxu0 0.0
    %272 = vmatpush1.msra.mxu0 0.0
    %273 = vmatprep.subr.mxu0 0.0
    %274 = vmatpush1.msra.mxu0 0.0
    %275 = vmatprep.subr.mxu0 0.0
    %276 = vmatpush1.msra.mxu0 0.0
    %277 = vmatprep.subr.mxu0 0.0
    %278 = vmatpush1.msra.mxu0 0.0
    %279 = vmatprep.subr.mxu0 0.0
    %280 = vmatpush1.msra.mxu0 0.0
    %281 = vmatprep.subr.mxu0 0.0
    %282 = vmatpush1.msra.mxu0 0.0
    %283 = vmatprep.subr.mxu0 0.0
    %284 = vmatpush1.msra.mxu0 0.0
    %285 = vmatprep.subr.mxu0 0.0
    %286 = vmatpush1.msra.mxu0 0.0
    %287 = vmatprep.subr.mxu0 0.0
    %288 = vmatpush1.msra.mxu0 0.0
    %289 = vmatprep.subr.mxu0 0.0
    %290 = vmatpush1.msra.mxu0 0.0
    %291 = vmatprep.subr.mxu0 0.0
    %292 = vmatpush1.msra.mxu0 0.0
    %293 = vmatprep.subr.mxu0 0.0
    %294 = vmatpush1.msra.mxu0 0.0
    %295 = vmatprep.subr.mxu0 0.0
    %296 = vmatpush1.msra.mxu0 0.0
    %297 = vmatprep.subr.mxu0 0.0
    %298 = vmatpush1.msra.mxu0 0.0
    %299 = vmatprep.mubr.f32.mxu0 0.0
    %300 = vmatmul.mubr.f32.gmra.mrb[0].mxu0 %v233
    %v301 = vpop.f32.mrb[0].mxu0
    %v302 = vadd.f32 0.0, %v301
    %v303 = vpop.f32.mrb[0].mxu0
    %304 = vdwg.mxu0
    %v305 = vadd.f32 %v229, 0.0
    %v306 = vadd.f32 %v57, %v200
    %v307 = vmul.f32 %v306, 0.5
    %v308 = vsel %vm89, %v306, %v307
    %v309 = vtanh.pop %v308
    %v310 = vmul.f32 %v309, 0.5
    %v311 = vadd.f32 %v310, 0.5
    %v312 = vsel %vm89, %v309, %v311
    %v313 = vmul.f32 %v312, %v107
    %315 = vrot.lane.b32.xlu0 %v312, 64
    %v316 = vpop.permute.xlu0 %315
    %v318 = vmul.f32 %v312, %v316
    %320 = vrot.lane.b32.xlu0 %v318, 32
    %v321 = vpop.permute.xlu0 %320
    %v323 = vadd.f32 %v313, %v321
    %v324 = vtanh.pop %v323
    %326 = vrot.lane.b32.xlu0 %v324, 64
    %v327 = vpop.permute.xlu0 %326
    %v329 = vmul.f32 %v312, %v327
    %vm330 = vcmp.gt.f32.partialorder %v329, 1.0
    %v331 = vsel %vm330, 1, 0
    %v332 = vcvt.s32.f32 %v331
    %334 = vrot.lane.b32.xlu0 %v332, 32
    %v335 = vpop.permute.xlu0 %334
    %338 = vrot.lane.b32.xlu0 %v329, 64
    %v339 = vpop.permute.xlu0 %338
    %v341 = vsel %vm125, %v335, %v339
    %v343 = vsel %vm127, %v341, 0
    %345 = vmatprep.subr.mxu0 %v59
    %346 = vmatpush1.msra.mxu0 %v58
    %347 = vmatprep.subr.mxu0 %v61
    %348 = vmatpush1.msra.mxu0 %v60
    %349 = vmatprep.subr.mxu0 %v63
    %350 = vmatpush1.msra.mxu0 %v62
    %351 = vmatprep.subr.mxu0 %v65
    %352 = vmatpush1.msra.mxu0 %v64
    %353 = vmatprep.subr.mxu0 %v67
    %354 = vmatpush1.msra.mxu0 %v66
    %355 = vmatprep.subr.mxu0 %v69
    %356 = vmatpush1.msra.mxu0 %v68
    %357 = vmatprep.subr.mxu0 %v71
    %358 = vmatpush1.msra.mxu0 %v70
    %359 = vmatprep.subr.mxu0 %v73
    %360 = vmatpush1.msra.mxu0 %v72
    %361 = vmatprep.subr.mxu0 0.0
    %362 = vmatpush1.msra.mxu0 0.0
    %363 = vmatprep.subr.mxu0 0.0
    %364 = vmatpush1.msra.mxu0 0.0
    %365 = vmatprep.subr.mxu0 0.0
    %366 = vmatpush1.msra.mxu0 0.0
    %367 = vmatprep.subr.mxu0 0.0
    %368 = vmatpush1.msra.mxu0 0.0
    %369 = vmatprep.subr.mxu0 0.0
    %370 = vmatpush1.msra.mxu0 0.0
    %371 = vmatprep.subr.mxu0 0.0
    %372 = vmatpush1.msra.mxu0 0.0
    %373 = vmatprep.subr.mxu0 0.0
    %374 = vmatpush1.msra.mxu0 0.0
    %375 = vmatprep.subr.mxu0 0.0
    %376 = vmatpush1.msra.mxu0 0.0
    %377 = vmatprep.subr.mxu0 0.0
    %378 = vmatpush1.msra.mxu0 0.0
    %379 = vmatprep.subr.mxu0 0.0
    %380 = vmatpush1.msra.mxu0 0.0
    %381 = vmatprep.subr.mxu0 0.0
    %382 = vmatpush1.msra.mxu0 0.0
    %383 = vmatprep.subr.mxu0 0.0
    %384 = vmatpush1.msra.mxu0 0.0
    %385 = vmatprep.subr.mxu0 0.0
    %386 = vmatpush1.msra.mxu0 0.0
    %387 = vmatprep.subr.mxu0 0.0
    %388 = vmatpush1.msra.mxu0 0.0
    %389 = vmatprep.subr.mxu0 0.0
    %390 = vmatpush1.msra.mxu0 0.0
    %391 = vmatprep.subr.mxu0 0.0
    %392 = vmatpush1.msra.mxu0 0.0
    %393 = vmatprep.subr.mxu0 0.0
    %394 = vmatpush1.msra.mxu0 0.0
    %395 = vmatprep.subr.mxu0 0.0
    %396 = vmatpush1.msra.mxu0 0.0
    %397 = vmatprep.subr.mxu0 0.0
    %398 = vmatpush1.msra.mxu0 0.0
    %399 = vmatprep.subr.mxu0 0.0
    %400 = vmatpush1.msra.mxu0 0.0
    %401 = vmatprep.subr.mxu0 0.0
    %402 = vmatpush1.msra.mxu0 0.0
    %403 = vmatprep.subr.mxu0 0.0
    %404 = vmatpush1.msra.mxu0 0.0
    %405 = vmatprep.subr.mxu0 0.0
    %406 = vmatpush1.msra.mxu0 0.0
    %407 = vmatprep.subr.mxu0 0.0
    %408 = vmatpush1.msra.mxu0 0.0
    %409 = vmatprep.mubr.f32.mxu0 0.0
    %410 = vmatmul.mubr.f32.gmra.mrb[0].mxu0 %v343
    %v411 = vpop.f32.mrb[0].mxu0
    %v412 = vadd.f32 0.0, %v411
    %v413 = vpop.f32.mrb[0].mxu0
    %v414 = vadd.f32 0.0, %v413
    %415 = vdwg.mxu0
    %v416 = vadd.f32 %v412, %v302
    %v417 = vadd.f32 %v416, %v83
    %v418 = vmul.f32 %v417, 0.5
    %v419 = vsel %vm89, %v417, %v418
    %v420 = vtanh.pop %v419
    %v421 = vmul.f32 %v420, 0.5
    %v422 = vadd.f32 %v421, 0.5
    %v423 = vsel %vm89, %v420, %v422
    %v424 = vmul.f32 %v423, %v220
    %426 = vrot.lane.b32.xlu0 %v423, 64
    %v427 = vpop.permute.xlu0 %426
    %v429 = vmul.f32 %v423, %v427
    %431 = vrot.lane.b32.xlu0 %v429, 32
    %v432 = vpop.permute.xlu0 %431
    %v434 = vadd.f32 %v424, %v432
    %v435 = vtanh.pop %v434
    %437 = vrot.lane.b32.xlu0 %v435, 64
    %v438 = vpop.permute.xlu0 %437
    %v440 = vmul.f32 %v423, %v438
    %vm441 = vcmp.gt.f32.partialorder %v440, 1.0
    %v442 = vsel %vm441, 1, 0
    %v443 = vcvt.s32.f32 %v442
    %445 = vrot.lane.b32.xlu0 %v440, 32
    %v446 = vpop.permute.xlu0 %445
    %v447 = vsel %vm125, %v446, 0
    %449 = vmatprep.subr.mxu0 0.0
    %450 = vmatpush1.msra.mxu0 %v74
    %451 = vmatprep.subr.mxu0 0.0
    %452 = vmatpush1.msra.mxu0 %v75
    %453 = vmatprep.subr.mxu0 0.0
    %454 = vmatpush1.msra.mxu0 %v76
    %455 = vmatprep.subr.mxu0 0.0
    %456 = vmatpush1.msra.mxu0 %v77
    %457 = vmatprep.subr.mxu0 0.0
    %458 = vmatpush1.msra.mxu0 0.0
    %459 = vmatprep.subr.mxu0 0.0
    %460 = vmatpush1.msra.mxu0 0.0
    %461 = vmatprep.subr.mxu0 0.0
    %462 = vmatpush1.msra.mxu0 0.0
    %463 = vmatprep.subr.mxu0 0.0
    %464 = vmatpush1.msra.mxu0 0.0
    %465 = vmatprep.subr.mxu0 0.0
    %466 = vmatpush1.msra.mxu0 0.0
    %467 = vmatprep.subr.mxu0 0.0
    %468 = vmatpush1.msra.mxu0 0.0
    %469 = vmatprep.subr.mxu0 0.0
    %470 = vmatpush1.msra.mxu0 0.0
    %471 = vmatprep.subr.mxu0 0.0
    %472 = vmatpush1.msra.mxu0 0.0
    %473 = vmatprep.subr.mxu0 0.0
    %474 = vmatpush1.msra.mxu0 0.0
    %475 = vmatprep.subr.mxu0 0.0
    %476 = vmatpush1.msra.mxu0 0.0
    %477 = vmatprep.subr.mxu0 0.0
    %478 = vmatpush1.msra.mxu0 0.0
    %479 = vmatprep.subr.mxu0 0.0
    %480 = vmatpush1.msra.mxu0 0.0
    %481 = vmatprep.subr.mxu0 0.0
    %482 = vmatpush1.msra.mxu0 0.0
    %483 = vmatprep.subr.mxu0 0.0
    %484 = vmatpush1.msra.mxu0 0.0
    %485 = vmatprep.subr.mxu0 0.0
    %486 = vmatpush1.msra.mxu0 0.0
    %487 = vmatprep.subr.mxu0 0.0
    %488 = vmatpush1.msra.mxu0 0.0
    %489 = vmatprep.subr.mxu0 0.0
    %490 = vmatpush1.msra.mxu0 0.0
    %491 = vmatprep.subr.mxu0 0.0
    %492 = vmatpush1.msra.mxu0 0.0
    %493 = vmatprep.subr.mxu0 0.0
    %494 = vmatpush1.msra.mxu0 0.0
    %495 = vmatprep.subr.mxu0 0.0
    %496 = vmatpush1.msra.mxu0 0.0
    %497 = vmatprep.subr.mxu0 0.0
    %498 = vmatpush1.msra.mxu0 0.0
    %499 = vmatprep.subr.mxu0 0.0
    %500 = vmatpush1.msra.mxu0 0.0
    %501 = vmatprep.subr.mxu0 0.0
    %502 = vmatpush1.msra.mxu0 0.0
    %503 = vmatprep.subr.mxu0 0.0
    %504 = vmatpush1.msra.mxu0 0.0
    %505 = vmatprep.subr.mxu0 0.0
    %506 = vmatpush1.msra.mxu0 0.0
    %507 = vmatprep.subr.mxu0 0.0
    %508 = vmatpush1.msra.mxu0 0.0
    %509 = vmatprep.subr.mxu0 0.0
    %510 = vmatpush1.msra.mxu0 0.0
    %511 = vmatprep.subr.mxu0 0.0
    %512 = vmatpush1.msra.mxu0 0.0
    %513 = vmatprep.mubr.f32.mxu0 0.0
    %514 = vmatmul.mubr.f32.gmra.mrb[0].mxu0 %v447
    %v515 = vpop.f32.mrb[0].mxu0
    %v516 = vadd.f32 0.0, %v515
    %v517 = vpop.f32.mrb[0].mxu0
    %518 = vdwg.mxu0
    %v519 = vadd.f32 %v305, %v443
    %v520 = vadd.f32 %v57, %v414
    %v521 = vmul.f32 %v520, 0.5
    %v522 = vsel %vm89, %v520, %v521
    %v523 = vtanh.pop %v522
    %v524 = vmul.f32 %v523, 0.5
    %v525 = vadd.f32 %v524, 0.5
    %v526 = vsel %vm89, %v523, %v525
    %v527 = vmul.f32 %v526, %v323
    %529 = vrot.lane.b32.xlu0 %v526, 64
    %v530 = vpop.permute.xlu0 %529
    %v532 = vmul.f32 %v526, %v530
    %534 = vrot.lane.b32.xlu0 %v532, 32
    %v535 = vpop.permute.xlu0 %534
    %v537 = vadd.f32 %v527, %v535
    %v538 = vtanh.pop %v537
    %540 = vrot.lane.b32.xlu0 %v538, 64
    %v541 = vpop.permute.xlu0 %540
    %v543 = vmul.f32 %v526, %v541
    %vm544 = vcmp.gt.f32.partialorder %v543, 1.0
    %v545 = vsel %vm544, 1, 0
    %v546 = vcvt.s32.f32 %v545
    %548 = vrot.lane.b32.xlu0 %v546, 32
    %v549 = vpop.permute.xlu0 %548
    %552 = vrot.lane.b32.xlu0 %v543, 64
    %v553 = vpop.permute.xlu0 %552
    %v555 = vsel %vm125, %v549, %v553
    %v557 = vsel %vm127, %v555, 0
    %559 = vmatprep.subr.mxu0 %v59
    %560 = vmatpush1.msra.mxu0 %v58
    %561 = vmatprep.subr.mxu0 %v61
    %562 = vmatpush1.msra.mxu0 %v60
    %563 = vmatprep.subr.mxu0 %v63
    %564 = vmatpush1.msra.mxu0 %v62
    %565 = vmatprep.subr.mxu0 %v65
    %566 = vmatpush1.msra.mxu0 %v64
    %567 = vmatprep.subr.mxu0 %v67
    %568 = vmatpush1.msra.mxu0 %v66
    %569 = vmatprep.subr.mxu0 %v69
    %570 = vmatpush1.msra.mxu0 %v68
    %571 = vmatprep.subr.mxu0 %v71
    %572 = vmatpush1.msra.mxu0 %v70
    %573 = vmatprep.subr.mxu0 %v73
    %574 = vmatpush1.msra.mxu0 %v72
    %575 = vmatprep.subr.mxu0 0.0
    %576 = vmatpush1.msra.mxu0 0.0
    %577 = vmatprep.subr.mxu0 0.0
    %578 = vmatpush1.msra.mxu0 0.0
    %579 = vmatprep.subr.mxu0 0.0
    %580 = vmatpush1.msra.mxu0 0.0
    %581 = vmatprep.subr.mxu0 0.0
    %582 = vmatpush1.msra.mxu0 0.0
    %583 = vmatprep.subr.mxu0 0.0
    %584 = vmatpush1.msra.mxu0 0.0
    %585 = vmatprep.subr.mxu0 0.0
    %586 = vmatpush1.msra.mxu0 0.0
    %587 = vmatprep.subr.mxu0 0.0
    %588 = vmatpush1.msra.mxu0 0.0
    %589 = vmatprep.subr.mxu0 0.0
    %590 = vmatpush1.msra.mxu0 0.0
    %591 = vmatprep.subr.mxu0 0.0
    %592 = vmatpush1.msra.mxu0 0.0
    %593 = vmatprep.subr.mxu0 0.0
    %594 = vmatpush1.msra.mxu0 0.0
    %595 = vmatprep.subr.mxu0 0.0
    %596 = vmatpush1.msra.mxu0 0.0
    %597 = vmatprep.subr.mxu0 0.0
    %598 = vmatpush1.msra.mxu0 0.0
    %599 = vmatprep.subr.mxu0 0.0
    %600 = vmatpush1.msra.mxu0 0.0
    %601 = vmatprep.subr.mxu0 0.0
    %602 = vmatpush1.msra.mxu0 0.0
    %603 = vmatprep.subr.mxu0 0.0
    %604 = vmatpush1.msra.mxu0 0.0
    %605 = vmatprep.subr.mxu0 0.0
    %606 = vmatpush1.msra.mxu0 0.0
    %607 = vmatprep.subr.mxu0 0.0
    %608 = vmatpush1.msra.mxu0 0.0
    %609 = vmatprep.subr.mxu0 0.0
    %610 = vmatpush1.msra.mxu0 0.0
    %611 = vmatprep.subr.mxu0 0.0
    %612 = vmatpush1.msra.mxu0 0.0
    %613 = vmatprep.subr.mxu0 0.0
    %614 = vmatpush1.msra.mxu0 0.0
    %615 = vmatprep.subr.mxu0 0.0
    %616 = vmatpush1.msra.mxu0 0.0
    %617 = vmatprep.subr.mxu0 0.0
    %618 = vmatpush1.msra.mxu0 0.0
    %619 = vmatprep.subr.mxu0 0.0
    %620 = vmatpush1.msra.mxu0 0.0
    %621 = vmatprep.subr.mxu0 0.0
    %622 = vmatpush1.msra.mxu0 0.0
    %623 = vmatprep.mubr.f32.mxu0 0.0
    %624 = vmatmul.mubr.f32.gmra.mrb[0].mxu0 %v557
    %v625 = vpop.f32.mrb[0].mxu0
    %v626 = vadd.f32 0.0, %v625
    %v627 = vpop.f32.mrb[0].mxu0
    %v628 = vadd.f32 0.0, %v627
    %629 = vdwg.mxu0
    %v630 = vadd.f32 %v626, %v516
    %v631 = vadd.f32 %v630, %v83
    %v632 = vmul.f32 %v631, 0.5
    %v633 = vsel %vm89, %v631, %v632
    %v634 = vtanh.pop %v633
    %v635 = vmul.f32 %v634, 0.5
    %v636 = vadd.f32 %v635, 0.5
    %v637 = vsel %vm89, %v634, %v636
    %v638 = vmul.f32 %v637, %v434
    %640 = vrot.lane.b32.xlu0 %v637, 64
    %v641 = vpop.permute.xlu0 %640
    %v643 = vmul.f32 %v637, %v641
    %645 = vrot.lane.b32.xlu0 %v643, 32
    %v646 = vpop.permute.xlu0 %645
    %v648 = vadd.f32 %v638, %v646
    %v649 = vtanh.pop %v648
    %651 = vrot.lane.b32.xlu0 %v649, 64
    %v652 = vpop.permute.xlu0 %651
    %v654 = vmul.f32 %v637, %v652
    %vm655 = vcmp.gt.f32.partialorder %v654, 1.0
    %v656 = vsel %vm655, 1, 0
    %v657 = vcvt.s32.f32 %v656
    %659 = vrot.lane.b32.xlu0 %v654, 32
    %v660 = vpop.permute.xlu0 %659
    %v661 = vsel %vm125, %v660, 0
    %663 = vmatprep.subr.mxu0 0.0
    %664 = vmatpush1.msra.mxu0 %v74
    %665 = vmatprep.subr.mxu0 0.0
    %666 = vmatpush1.msra.mxu0 %v75
    %667 = vmatprep.subr.mxu0 0.0
    %668 = vmatpush1.msra.mxu0 %v76
    %669 = vmatprep.subr.mxu0 0.0
    %670 = vmatpush1.msra.mxu0 %v77
    %671 = vmatprep.subr.mxu0 0.0
    %672 = vmatpush1.msra.mxu0 0.0
    %673 = vmatprep.subr.mxu0 0.0
    %674 = vmatpush1.msra.mxu0 0.0
    %675 = vmatprep.subr.mxu0 0.0
    %676 = vmatpush1.msra.mxu0 0.0
    %677 = vmatprep.subr.mxu0 0.0
    %678 = vmatpush1.msra.mxu0 0.0
    %679 = vmatprep.subr.mxu0 0.0
    %680 = vmatpush1.msra.mxu0 0.0
    %681 = vmatprep.subr.mxu0 0.0
    %682 = vmatpush1.msra.mxu0 0.0
    %683 = vmatprep.subr.mxu0 0.0
    %684 = vmatpush1.msra.mxu0 0.0
    %685 = vmatprep.subr.mxu0 0.0
    %686 = vmatpush1.msra.mxu0 0.0
    %687 = vmatprep.subr.mxu0 0.0
    %688 = vmatpush1.msra.mxu0 0.0
    %689 = vmatprep.subr.mxu0 0.0
    %690 = vmatpush1.msra.mxu0 0.0
    %691 = vmatprep.subr.mxu0 0.0
    %692 = vmatpush1.msra.mxu0 0.0
    %693 = vmatprep.subr.mxu0 0.0
    %694 = vmatpush1.msra.mxu0 0.0
    %695 = vmatprep.subr.mxu0 0.0
    %696 = vmatpush1.msra.mxu0 0.0
    %697 = vmatprep.subr.mxu0 0.0
    %698 = vmatpush1.msra.mxu0 0.0
    %699 = vmatprep.subr.mxu0 0.0
    %700 = vmatpush1.msra.mxu0 0.0
    %701 = vmatprep.subr.mxu0 0.0
    %702 = vmatpush1.msra.mxu0 0.0
    %703 = vmatprep.subr.mxu0 0.0
    %704 = vmatpush1.msra.mxu0 0.0
    %705 = vmatprep.subr.mxu0 0.0
    %706 = vmatpush1.msra.mxu0 0.0
    %707 = vmatprep.subr.mxu0 0.0
    %708 = vmatpush1.msra.mxu0 0.0
    %709 = vmatprep.subr.mxu0 0.0
    %710 = vmatpush1.msra.mxu0 0.0
    %711 = vmatprep.subr.mxu0 0.0
    %712 = vmatpush1.msra.mxu0 0.0
    %713 = vmatprep.subr.mxu0 0.0
    %714 = vmatpush1.msra.mxu0 0.0
    %715 = vmatprep.subr.mxu0 0.0
    %716 = vmatpush1.msra.mxu0 0.0
    %717 = vmatprep.subr.mxu0 0.0
    %718 = vmatpush1.msra.mxu0 0.0
    %719 = vmatprep.subr.mxu0 0.0
    %720 = vmatpush1.msra.mxu0 0.0
    %721 = vmatprep.subr.mxu0 0.0
    %722 = vmatpush1.msra.mxu0 0.0
    %723 = vmatprep.subr.mxu0 0.0
    %724 = vmatpush1.msra.mxu0 0.0
    %725 = vmatprep.subr.mxu0 0.0
    %726 = vmatpush1.msra.mxu0 0.0
    %727 = vmatprep.mubr.f32.mxu0 0.0
    %728 = vmatmul.mubr.f32.gmra.mrb[0].mxu0 %v661
    %v729 = vpop.f32.mrb[0].mxu0
    %v730 = vadd.f32 0.0, %v729
    %v731 = vpop.f32.mrb[0].mxu0
    %732 = vdwg.mxu0
    %v733 = vadd.f32 %v519, %v657
    %v734 = vadd.f32 %v57, %v628
    %v735 = vmul.f32 %v734, 0.5
    %v736 = vsel %vm89, %v734, %v735
    %v737 = vtanh.pop %v736
    %v738 = vmul.f32 %v737, 0.5
    %v739 = vadd.f32 %v738, 0.5
    %v740 = vsel %vm89, %v737, %v739
    %v741 = vmul.f32 %v740, %v537
    %743 = vrot.lane.b32.xlu0 %v740, 64
    %v744 = vpop.permute.xlu0 %743
    %v746 = vmul.f32 %v740, %v744
    %748 = vrot.lane.b32.xlu0 %v746, 32
    %v749 = vpop.permute.xlu0 %748
    %v751 = vadd.f32 %v741, %v749
    %v752 = vtanh.pop %v751
    %754 = vrot.lane.b32.xlu0 %v752, 64
    %v755 = vpop.permute.xlu0 %754
    %v757 = vmul.f32 %v740, %v755
    %vm758 = vcmp.gt.f32.partialorder %v757, 1.0
    %v759 = vsel %vm758, 1, 0
    %v760 = vcvt.s32.f32 %v759
    %762 = vrot.lane.b32.xlu0 %v760, 32
    %v763 = vpop.permute.xlu0 %762
    %766 = vrot.lane.b32.xlu0 %v757, 64
    %v767 = vpop.permute.xlu0 %766
    %v769 = vsel %vm125, %v763, %v767
    %v771 = vsel %vm127, %v769, 0
    %773 = vmatprep.subr.mxu0 %v59
    %774 = vmatpush1.msra.mxu0 %v58
    %775 = vmatprep.subr.mxu0 %v61
    %776 = vmatpush1.msra.mxu0 %v60
    %777 = vmatprep.subr.mxu0 %v63
    %778 = vmatpush1.msra.mxu0 %v62
    %779 = vmatprep.subr.mxu0 %v65
    %780 = vmatpush1.msra.mxu0 %v64
    %781 = vmatprep.subr.mxu0 %v67
    %782 = vmatpush1.msra.mxu0 %v66
    %783 = vmatprep.subr.mxu0 %v69
    %784 = vmatpush1.msra.mxu0 %v68
    %785 = vmatprep.subr.mxu0 %v71
    %786 = vmatpush1.msra.mxu0 %v70
    %787 = vmatprep.subr.mxu0 %v73
    %788 = vmatpush1.msra.mxu0 %v72
    %789 = vmatprep.subr.mxu0 0.0
    %790 = vmatpush1.msra.mxu0 0.0
    %791 = vmatprep.subr.mxu0 0.0
    %792 = vmatpush1.msra.mxu0 0.0
    %793 = vmatprep.subr.mxu0 0.0
    %794 = vmatpush1.msra.mxu0 0.0
    %795 = vmatprep.subr.mxu0 0.0
    %796 = vmatpush1.msra.mxu0 0.0
    %797 = vmatprep.subr.mxu0 0.0
    %798 = vmatpush1.msra.mxu0 0.0
    %799 = vmatprep.subr.mxu0 0.0
    %800 = vmatpush1.msra.mxu0 0.0
    %801 = vmatprep.subr.mxu0 0.0
    %802 = vmatpush1.msra.mxu0 0.0
    %803 = vmatprep.subr.mxu0 0.0
    %804 = vmatpush1.msra.mxu0 0.0
    %805 = vmatprep.subr.mxu0 0.0
    %806 = vmatpush1.msra.mxu0 0.0
    %807 = vmatprep.subr.mxu0 0.0
    %808 = vmatpush1.msra.mxu0 0.0
    %809 = vmatprep.subr.mxu0 0.0
    %810 = vmatpush1.msra.mxu0 0.0
    %811 = vmatprep.subr.mxu0 0.0
    %812 = vmatpush1.msra.mxu0 0.0
    %813 = vmatprep.subr.mxu0 0.0
    %814 = vmatpush1.msra.mxu0 0.0
    %815 = vmatprep.subr.mxu0 0.0
    %816 = vmatpush1.msra.mxu0 0.0
    %817 = vmatprep.subr.mxu0 0.0
    %818 = vmatpush1.msra.mxu0 0.0
    %819 = vmatprep.subr.mxu0 0.0
    %820 = vmatpush1.msra.mxu0 0.0
    %821 = vmatprep.subr.mxu0 0.0
    %822 = vmatpush1.msra.mxu0 0.0
    %823 = vmatprep.subr.mxu0 0.0
    %824 = vmatpush1.msra.mxu0 0.0
    %825 = vmatprep.subr.mxu0 0.0
    %826 = vmatpush1.msra.mxu0 0.0
    %827 = vmatprep.subr.mxu0 0.0
    %828 = vmatpush1.msra.mxu0 0.0
    %829 = vmatprep.subr.mxu0 0.0
    %830 = vmatpush1.msra.mxu0 0.0
    %831 = vmatprep.subr.mxu0 0.0
    %832 = vmatpush1.msra.mxu0 0.0
    %833 = vmatprep.subr.mxu0 0.0
    %834 = vmatpush1.msra.mxu0 0.0
    %835 = vmatprep.subr.mxu0 0.0
    %836 = vmatpush1.msra.mxu0 0.0
    %837 = vmatprep.mubr.f32.mxu0 0.0
    %838 = vmatmul.mubr.f32.gmra.mrb[0].mxu0 %v771
    %v839 = vpop.f32.mrb[0].mxu0
    %v840 = vadd.f32 0.0, %v839
    %v841 = vpop.f32.mrb[0].mxu0
    %v842 = vadd.f32 0.0, %v841
    %843 = vdwg.mxu0
    %v844 = vadd.f32 %v840, %v730
    %v845 = vadd.f32 %v844, %v83
    %v846 = vmul.f32 %v845, 0.5
    %v847 = vsel %vm89, %v845, %v846
    %v848 = vtanh.pop %v847
    %v849 = vmul.f32 %v848, 0.5
    %v850 = vadd.f32 %v849, 0.5
    %v851 = vsel %vm89, %v848, %v850
    %v852 = vmul.f32 %v851, %v648
    %854 = vrot.lane.b32.xlu0 %v851, 64
    %v855 = vpop.permute.xlu0 %854
    %v857 = vmul.f32 %v851, %v855
    %859 = vrot.lane.b32.xlu0 %v857, 32
    %v860 = vpop.permute.xlu0 %859
    %v862 = vadd.f32 %v852, %v860
    %v863 = vtanh.pop %v862
    %865 = vrot.lane.b32.xlu0 %v863, 64
    %v866 = vpop.permute.xlu0 %865
    %v868 = vmul.f32 %v851, %v866
    %vm869 = vcmp.gt.f32.partialorder %v868, 1.0
    %v870 = vsel %vm869, 1, 0
    %v871 = vcvt.s32.f32 %v870
    %873 = vrot.lane.b32.xlu0 %v868, 32
    %v874 = vpop.permute.xlu0 %873
    %v875 = vsel %vm125, %v874, 0
    %877 = vmatprep.subr.mxu0 0.0
    %878 = vmatpush1.msra.mxu0 %v74
    %879 = vmatprep.subr.mxu0 0.0
    %880 = vmatpush1.msra.mxu0 %v75
    %881 = vmatprep.subr.mxu0 0.0
    %882 = vmatpush1.msra.mxu0 %v76
    %883 = vmatprep.subr.mxu0 0.0
    %884 = vmatpush1.msra.mxu0 %v77
    %885 = vmatprep.subr.mxu0 0.0
    %886 = vmatpush1.msra.mxu0 0.0
    %887 = vmatprep.subr.mxu0 0.0
    %888 = vmatpush1.msra.mxu0 0.0
    %889 = vmatprep.subr.mxu0 0.0
    %890 = vmatpush1.msra.mxu0 0.0
    %891 = vmatprep.subr.mxu0 0.0
    %892 = vmatpush1.msra.mxu0 0.0
    %893 = vmatprep.subr.mxu0 0.0
    %894 = vmatpush1.msra.mxu0 0.0
    %895 = vmatprep.subr.mxu0 0.0
    %896 = vmatpush1.msra.mxu0 0.0
    %897 = vmatprep.subr.mxu0 0.0
    %898 = vmatpush1.msra.mxu0 0.0
    %899 = vmatprep.subr.mxu0 0.0
    %900 = vmatpush1.msra.mxu0 0.0
    %901 = vmatprep.subr.mxu0 0.0
    %902 = vmatpush1.msra.mxu0 0.0
    %903 = vmatprep.subr.mxu0 0.0
    %904 = vmatpush1.msra.mxu0 0.0
    %905 = vmatprep.subr.mxu0 0.0
    %906 = vmatpush1.msra.mxu0 0.0
    %907 = vmatprep.subr.mxu0 0.0
    %908 = vmatpush1.msra.mxu0 0.0
    %909 = vmatprep.subr.mxu0 0.0
    %910 = vmatpush1.msra.mxu0 0.0
    %911 = vmatprep.subr.mxu0 0.0
    %912 = vmatpush1.msra.mxu0 0.0
    %913 = vmatprep.subr.mxu0 0.0
    %914 = vmatpush1.msra.mxu0 0.0
    %915 = vmatprep.subr.mxu0 0.0
    %916 = vmatpush1.msra.mxu0 0.0
    %917 = vmatprep.subr.mxu0 0.0
    %918 = vmatpush1.msra.mxu0 0.0
    %919 = vmatprep.subr.mxu0 0.0
    %920 = vmatpush1.msra.mxu0 0.0
    %921 = vmatprep.subr.mxu0 0.0
    %922 = vmatpush1.msra.mxu0 0.0
    %923 = vmatprep.subr.mxu0 0.0
    %924 = vmatpush1.msra.mxu0 0.0
    %925 = vmatprep.subr.mxu0 0.0
    %926 = vmatpush1.msra.mxu0 0.0
    %927 = vmatprep.subr.mxu0 0.0
    %928 = vmatpush1.msra.mxu0 0.0
    %929 = vmatprep.subr.mxu0 0.0
    %930 = vmatpush1.msra.mxu0 0.0
    %931 = vmatprep.subr.mxu0 0.0
    %932 = vmatpush1.msra.mxu0 0.0
    %933 = vmatprep.subr.mxu0 0.0
    %934 = vmatpush1.msra.mxu0 0.0
    %935 = vmatprep.subr.mxu0 0.0
    %936 = vmatpush1.msra.mxu0 0.0
    %937 = vmatprep.subr.mxu0 0.0
    %938 = vmatpush1.msra.mxu0 0.0
    %939 = vmatprep.subr.mxu0 0.0
    %940 = vmatpush1.msra.mxu0 0.0
    %941 = vmatprep.mubr.f32.mxu0 0.0
    %942 = vmatmul.mubr.f32.gmra.mrb[0].mxu0 %v875
    %v943 = vpop.f32.mrb[0].mxu0
    %v944 = vadd.f32 0.0, %v943
    %v945 = vpop.f32.mrb[0].mxu0
    %946 = vdwg.mxu0
    %v947 = vadd.f32 %v733, %v871
    %v948 = vadd.f32 %v57, %v842
    %v949 = vmul.f32 %v948, 0.5
    %v950 = vsel %vm89, %v948, %v949
    %v951 = vtanh.pop %v950
    %v952 = vmul.f32 %v951, 0.5
    %v953 = vadd.f32 %v952, 0.5
    %v954 = vsel %vm89, %v951, %v953
    %v955 = vmul.f32 %v954, %v751
    %957 = vrot.lane.b32.xlu0 %v954, 64
    %v958 = vpop.permute.xlu0 %957
    %v960 = vmul.f32 %v954, %v958
    %962 = vrot.lane.b32.xlu0 %v960, 32
    %v963 = vpop.permute.xlu0 %962
    %v965 = vadd.f32 %v955, %v963
    %v966 = vtanh.pop %v965
    %968 = vrot.lane.b32.xlu0 %v966, 64
    %v969 = vpop.permute.xlu0 %968
    %v971 = vmul.f32 %v954, %v969
    %vm972 = vcmp.gt.f32.partialorder %v971, 1.0
    %v973 = vsel %vm972, 1, 0
    %v974 = vcvt.s32.f32 %v973
    %976 = vrot.lane.b32.xlu0 %v974, 32
    %v977 = vpop.permute.xlu0 %976
    %980 = vrot.lane.b32.xlu0 %v971, 64
    %v981 = vpop.permute.xlu0 %980
    %v983 = vsel %vm125, %v977, %v981
    %v985 = vsel %vm127, %v983, 0
    %987 = vmatprep.subr.mxu0 %v59
    %988 = vmatpush1.msra.mxu0 %v58
    %989 = vmatprep.subr.mxu0 %v61
    %990 = vmatpush1.msra.mxu0 %v60
    %991 = vmatprep.subr.mxu0 %v63
    %992 = vmatpush1.msra.mxu0 %v62
    %993 = vmatprep.subr.mxu0 %v65
    %994 = vmatpush1.msra.mxu0 %v64
    %995 = vmatprep.subr.mxu0 %v67
    %996 = vmatpush1.msra.mxu0 %v66
    %997 = vmatprep.subr.mxu0 %v69
    %998 = vmatpush1.msra.mxu0 %v68
    %999 = vmatprep.subr.mxu0 %v71
    %1000 = vmatpush1.msra.mxu0 %v70
    %1001 = vmatprep.subr.mxu0 %v73
    %1002 = vmatpush1.msra.mxu0 %v72
    %1003 = vmatprep.subr.mxu0 0.0
    %1004 = vmatpush1.msra.mxu0 0.0
    %1005 = vmatprep.subr.mxu0 0.0
    %1006 = vmatpush1.msra.mxu0 0.0
    %1007 = vmatprep.subr.mxu0 0.0
    %1008 = vmatpush1.msra.mxu0 0.0
    %1009 = vmatprep.subr.mxu0 0.0
    %1010 = vmatpush1.msra.mxu0 0.0
    %1011 = vmatprep.subr.mxu0 0.0
    %1012 = vmatpush1.msra.mxu0 0.0
    %1013 = vmatprep.subr.mxu0 0.0
    %1014 = vmatpush1.msra.mxu0 0.0
    %1015 = vmatprep.subr.mxu0 0.0
    %1016 = vmatpush1.msra.mxu0 0.0
    %1017 = vmatprep.subr.mxu0 0.0
    %1018 = vmatpush1.msra.mxu0 0.0
    %1019 = vmatprep.subr.mxu0 0.0
    %1020 = vmatpush1.msra.mxu0 0.0
    %1021 = vmatprep.subr.mxu0 0.0
    %1022 = vmatpush1.msra.mxu0 0.0
    %1023 = vmatprep.subr.mxu0 0.0
    %1024 = vmatpush1.msra.mxu0 0.0
    %1025 = vmatprep.subr.mxu0 0.0
    %1026 = vmatpush1.msra.mxu0 0.0
    %1027 = vmatprep.subr.mxu0 0.0
    %1028 = vmatpush1.msra.mxu0 0.0
    %1029 = vmatprep.subr.mxu0 0.0
    %1030 = vmatpush1.msra.mxu0 0.0
    %1031 = vmatprep.subr.mxu0 0.0
    %1032 = vmatpush1.msra.mxu0 0.0
    %1033 = vmatprep.subr.mxu0 0.0
    %1034 = vmatpush1.msra.mxu0 0.0
    %1035 = vmatprep.subr.mxu0 0.0
    %1036 = vmatpush1.msra.mxu0 0.0
    %1037 = vmatprep.subr.mxu0 0.0
    %1038 = vmatpush1.msra.mxu0 0.0
    %1039 = vmatprep.subr.mxu0 0.0
    %1040 = vmatpush1.msra.mxu0 0.0
    %1041 = vmatprep.subr.mxu0 0.0
    %1042 = vmatpush1.msra.mxu0 0.0
    %1043 = vmatprep.subr.mxu0 0.0
    %1044 = vmatpush1.msra.mxu0 0.0
    %1045 = vmatprep.subr.mxu0 0.0
    %1046 = vmatpush1.msra.mxu0 0.0
    %1047 = vmatprep.subr.mxu0 0.0
    %1048 = vmatpush1.msra.mxu0 0.0
    %1049 = vmatprep.subr.mxu0 0.0
    %1050 = vmatpush1.msra.mxu0 0.0
    %1051 = vmatprep.mubr.f32.mxu0 0.0
    %1052 = vmatmul.mubr.f32.gmra.mrb[0].mxu0 %v985
    %v1053 = vpop.f32.mrb[0].mxu0
    %v1054 = vadd.f32 0.0, %v1053
    %v1055 = vpop.f32.mrb[0].mxu0
    %v1056 = vadd.f32 0.0, %v1055
    %1057 = vdwg.mxu0
    %v1058 = vadd.f32 %v1054, %v944
    %v1059 = vadd.f32 %v1058, %v83
    %v1060 = vmul.f32 %v1059, 0.5
    %v1061 = vsel %vm89, %v1059, %v1060
    %v1062 = vtanh.pop %v1061
    %v1063 = vmul.f32 %v1062, 0.5
    %v1064 = vadd.f32 %v1063, 0.5
    %v1065 = vsel %vm89, %v1062, %v1064
    %v1066 = vmul.f32 %v1065, %v862
    %1068 = vrot.lane.b32.xlu0 %v1065, 64
    %v1069 = vpop.permute.xlu0 %1068
    %v1071 = vmul.f32 %v1065, %v1069
    %1073 = vrot.lane.b32.xlu0 %v1071, 32
    %v1074 = vpop.permute.xlu0 %1073
    %v1076 = vadd.f32 %v1066, %v1074
    %v1077 = vtanh.pop %v1076
    %1079 = vrot.lane.b32.xlu0 %v1077, 64
    %v1080 = vpop.permute.xlu0 %1079
    %v1082 = vmul.f32 %v1065, %v1080
    %vm1083 = vcmp.gt.f32.partialorder %v1082, 1.0
    %v1084 = vsel %vm1083, 1, 0
    %v1085 = vcvt.s32.f32 %v1084
    %1087 = vrot.lane.b32.xlu0 %v1082, 32
    %v1088 = vpop.permute.xlu0 %1087
    %v1089 = vsel %vm125, %v1088, 0
    %1091 = vmatprep.subr.mxu0 0.0
    %1092 = vmatpush1.msra.mxu0 %v74
    %1093 = vmatprep.subr.mxu0 0.0
    %1094 = vmatpush1.msra.mxu0 %v75
    %1095 = vmatprep.subr.mxu0 0.0
    %1096 = vmatpush1.msra.mxu0 %v76
    %1097 = vmatprep.subr.mxu0 0.0
    %1098 = vmatpush1.msra.mxu0 %v77
    %1099 = vmatprep.subr.mxu0 0.0
    %1100 = vmatpush1.msra.mxu0 0.0
    %1101 = vmatprep.subr.mxu0 0.0
    %1102 = vmatpush1.msra.mxu0 0.0
    %1103 = vmatprep.subr.mxu0 0.0
    %1104 = vmatpush1.msra.mxu0 0.0
    %1105 = vmatprep.subr.mxu0 0.0
    %1106 = vmatpush1.msra.mxu0 0.0
    %1107 = vmatprep.subr.mxu0 0.0
    %1108 = vmatpush1.msra.mxu0 0.0
    %1109 = vmatprep.subr.mxu0 0.0
    %1110 = vmatpush1.msra.mxu0 0.0
    %1111 = vmatprep.subr.mxu0 0.0
    %1112 = vmatpush1.msra.mxu0 0.0
    %1113 = vmatprep.subr.mxu0 0.0
    %1114 = vmatpush1.msra.mxu0 0.0
    %1115 = vmatprep.subr.mxu0 0.0
    %1116 = vmatpush1.msra.mxu0 0.0
    %1117 = vmatprep.subr.mxu0 0.0
    %1118 = vmatpush1.msra.mxu0 0.0
    %1119 = vmatprep.subr.mxu0 0.0
    %1120 = vmatpush1.msra.mxu0 0.0
    %1121 = vmatprep.subr.mxu0 0.0
    %1122 = vmatpush1.msra.mxu0 0.0
    %1123 = vmatprep.subr.mxu0 0.0
    %1124 = vmatpush1.msra.mxu0 0.0
    %1125 = vmatprep.subr.mxu0 0.0
    %1126 = vmatpush1.msra.mxu0 0.0
    %1127 = vmatprep.subr.mxu0 0.0
    %1128 = vmatpush1.msra.mxu0 0.0
    %1129 = vmatprep.subr.mxu0 0.0
    %1130 = vmatpush1.msra.mxu0 0.0
    %1131 = vmatprep.subr.mxu0 0.0
    %1132 = vmatpush1.msra.mxu0 0.0
    %1133 = vmatprep.subr.mxu0 0.0
    %1134 = vmatpush1.msra.mxu0 0.0
    %1135 = vmatprep.subr.mxu0 0.0
    %1136 = vmatpush1.msra.mxu0 0.0
    %1137 = vmatprep.subr.mxu0 0.0
    %1138 = vmatpush1.msra.mxu0 0.0
    %1139 = vmatprep.subr.mxu0 0.0
    %1140 = vmatpush1.msra.mxu0 0.0
    %1141 = vmatprep.subr.mxu0 0.0
    %1142 = vmatpush1.msra.mxu0 0.0
    %1143 = vmatprep.subr.mxu0 0.0
    %1144 = vmatpush1.msra.mxu0 0.0
    %1145 = vmatprep.subr.mxu0 0.0
    %1146 = vmatpush1.msra.mxu0 0.0
    %1147 = vmatprep.subr.mxu0 0.0
    %1148 = vmatpush1.msra.mxu0 0.0
    %1149 = vmatprep.subr.mxu0 0.0
    %1150 = vmatpush1.msra.mxu0 0.0
    %1151 = vmatprep.subr.mxu0 0.0
    %1152 = vmatpush1.msra.mxu0 0.0
    %1153 = vmatprep.subr.mxu0 0.0
    %1154 = vmatpush1.msra.mxu0 0.0
    %1155 = vmatprep.mubr.f32.mxu0 0.0
    %1156 = vmatmul.mubr.f32.gmra.mrb[0].mxu0 %v1089
    %v1157 = vpop.f32.mrb[0].mxu0
    %v1158 = vadd.f32 0.0, %v1157
    %v1159 = vpop.f32.mrb[0].mxu0
    %1160 = vdwg.mxu0
    %v1161 = vadd.f32 %v947, %v1085
    %v1162 = vadd.f32 %v57, %v1056
    %v1163 = vmul.f32 %v1162, 0.5
    %v1164 = vsel %vm89, %v1162, %v1163
    %v1165 = vtanh.pop %v1164
    %v1166 = vmul.f32 %v1165, 0.5
    %v1167 = vadd.f32 %v1166, 0.5
    %v1168 = vsel %vm89, %v1165, %v1167
    %v1169 = vmul.f32 %v1168, %v965
    %1171 = vrot.lane.b32.xlu0 %v1168, 64
    %v1172 = vpop.permute.xlu0 %1171
    %v1174 = vmul.f32 %v1168, %v1172
    %1176 = vrot.lane.b32.xlu0 %v1174, 32
    %v1177 = vpop.permute.xlu0 %1176
    %v1179 = vadd.f32 %v1169, %v1177
    %v1180 = vtanh.pop %v1179
    %1182 = vrot.lane.b32.xlu0 %v1180, 64
    %v1183 = vpop.permute.xlu0 %1182
    %v1185 = vmul.f32 %v1168, %v1183
    %vm1186 = vcmp.gt.f32.partialorder %v1185, 1.0
    %v1187 = vsel %vm1186, 1, 0
    %v1188 = vcvt.s32.f32 %v1187
    %1190 = vrot.lane.b32.xlu0 %v1188, 32
    %v1191 = vpop.permute.xlu0 %1190
    %1194 = vrot.lane.b32.xlu0 %v1185, 64
    %v1195 = vpop.permute.xlu0 %1194
    %v1197 = vsel %vm125, %v1191, %v1195
    %v1199 = vsel %vm127, %v1197, 0
    %1201 = vmatprep.subr.mxu0 %v59
    %1202 = vmatpush1.msra.mxu0 %v58
    %1203 = vmatprep.subr.mxu0 %v61
    %1204 = vmatpush1.msra.mxu0 %v60
    %1205 = vmatprep.subr.mxu0 %v63
    %1206 = vmatpush1.msra.mxu0 %v62
    %1207 = vmatprep.subr.mxu0 %v65
    %1208 = vmatpush1.msra.mxu0 %v64
    %1209 = vmatprep.subr.mxu0 %v67
    %1210 = vmatpush1.msra.mxu0 %v66
    %1211 = vmatprep.subr.mxu0 %v69
    %1212 = vmatpush1.msra.mxu0 %v68
    %1213 = vmatprep.subr.mxu0 %v71
    %1214 = vmatpush1.msra.mxu0 %v70
    %1215 = vmatprep.subr.mxu0 %v73
    %1216 = vmatpush1.msra.mxu0 %v72
    %1217 = vmatprep.subr.mxu0 0.0
    %1218 = vmatpush1.msra.mxu0 0.0
    %1219 = vmatprep.subr.mxu0 0.0
    %1220 = vmatpush1.msra.mxu0 0.0
    %1221 = vmatprep.subr.mxu0 0.0
    %1222 = vmatpush1.msra.mxu0 0.0
    %1223 = vmatprep.subr.mxu0 0.0
    %1224 = vmatpush1.msra.mxu0 0.0
    %1225 = vmatprep.subr.mxu0 0.0
    %1226 = vmatpush1.msra.mxu0 0.0
    %1227 = vmatprep.subr.mxu0 0.0
    %1228 = vmatpush1.msra.mxu0 0.0
    %1229 = vmatprep.subr.mxu0 0.0
    %1230 = vmatpush1.msra.mxu0 0.0
    %1231 = vmatprep.subr.mxu0 0.0
    %1232 = vmatpush1.msra.mxu0 0.0
    %1233 = vmatprep.subr.mxu0 0.0
    %1234 = vmatpush1.msra.mxu0 0.0
    %1235 = vmatprep.subr.mxu0 0.0
    %1236 = vmatpush1.msra.mxu0 0.0
    %1237 = vmatprep.subr.mxu0 0.0
    %1238 = vmatpush1.msra.mxu0 0.0
    %1239 = vmatprep.subr.mxu0 0.0
    %1240 = vmatpush1.msra.mxu0 0.0
    %1241 = vmatprep.subr.mxu0 0.0
    %1242 = vmatpush1.msra.mxu0 0.0
    %1243 = vmatprep.subr.mxu0 0.0
    %1244 = vmatpush1.msra.mxu0 0.0
    %1245 = vmatprep.subr.mxu0 0.0
    %1246 = vmatpush1.msra.mxu0 0.0
    %1247 = vmatprep.subr.mxu0 0.0
    %1248 = vmatpush1.msra.mxu0 0.0
    %1249 = vmatprep.subr.mxu0 0.0
    %1250 = vmatpush1.msra.mxu0 0.0
    %1251 = vmatprep.subr.mxu0 0.0
    %1252 = vmatpush1.msra.mxu0 0.0
    %1253 = vmatprep.subr.mxu0 0.0
    %1254 = vmatpush1.msra.mxu0 0.0
    %1255 = vmatprep.subr.mxu0 0.0
    %1256 = vmatpush1.msra.mxu0 0.0
    %1257 = vmatprep.subr.mxu0 0.0
    %1258 = vmatpush1.msra.mxu0 0.0
    %1259 = vmatprep.subr.mxu0 0.0
    %1260 = vmatpush1.msra.mxu0 0.0
    %1261 = vmatprep.subr.mxu0 0.0
    %1262 = vmatpush1.msra.mxu0 0.0
    %1263 = vmatprep.subr.mxu0 0.0
    %1264 = vmatpush1.msra.mxu0 0.0
    %1265 = vmatprep.mubr.f32.mxu0 0.0
    %1266 = vmatmul.mubr.f32.gmra.mrb[0].mxu0 %v1199
    %v1267 = vpop.f32.mrb[0].mxu0
    %v1268 = vadd.f32 0.0, %v1267
    %v1269 = vpop.f32.mrb[0].mxu0
    %v1270 = vadd.f32 0.0, %v1269
    %1271 = vdwg.mxu0
    %v1272 = vadd.f32 %v1268, %v1158
    %v1273 = vadd.f32 %v1272, %v83
    %v1274 = vmul.f32 %v1273, 0.5
    %v1275 = vsel %vm89, %v1273, %v1274
    %v1276 = vtanh.pop %v1275
    %v1277 = vmul.f32 %v1276, 0.5
    %v1278 = vadd.f32 %v1277, 0.5
    %v1279 = vsel %vm89, %v1276, %v1278
    %v1280 = vmul.f32 %v1279, %v1076
    %1282 = vrot.lane.b32.xlu0 %v1279, 64
    %v1283 = vpop.permute.xlu0 %1282
    %v1285 = vmul.f32 %v1279, %v1283
    %1287 = vrot.lane.b32.xlu0 %v1285, 32
    %v1288 = vpop.permute.xlu0 %1287
    %v1290 = vadd.f32 %v1280, %v1288
    %v1291 = vtanh.pop %v1290
    %1293 = vrot.lane.b32.xlu0 %v1291, 64
    %v1294 = vpop.permute.xlu0 %1293
    %v1296 = vmul.f32 %v1279, %v1294
    %vm1297 = vcmp.gt.f32.partialorder %v1296, 1.0
    %v1298 = vsel %vm1297, 1, 0
    %v1299 = vcvt.s32.f32 %v1298
    %1301 = vrot.lane.b32.xlu0 %v1296, 32
    %v1302 = vpop.permute.xlu0 %1301
    %v1303 = vsel %vm125, %v1302, 0
    %1305 = vmatprep.subr.mxu0 0.0
    %1306 = vmatpush1.msra.mxu0 %v74
    %1307 = vmatprep.subr.mxu0 0.0
    %1308 = vmatpush1.msra.mxu0 %v75
    %1309 = vmatprep.subr.mxu0 0.0
    %1310 = vmatpush1.msra.mxu0 %v76
    %1311 = vmatprep.subr.mxu0 0.0
    %1312 = vmatpush1.msra.mxu0 %v77
    %1313 = vmatprep.subr.mxu0 0.0
    %1314 = vmatpush1.msra.mxu0 0.0
    %1315 = vmatprep.subr.mxu0 0.0
    %1316 = vmatpush1.msra.mxu0 0.0
    %1317 = vmatprep.subr.mxu0 0.0
    %1318 = vmatpush1.msra.mxu0 0.0
    %1319 = vmatprep.subr.mxu0 0.0
    %1320 = vmatpush1.msra.mxu0 0.0
    %1321 = vmatprep.subr.mxu0 0.0
    %1322 = vmatpush1.msra.mxu0 0.0
    %1323 = vmatprep.subr.mxu0 0.0
    %1324 = vmatpush1.msra.mxu0 0.0
    %1325 = vmatprep.subr.mxu0 0.0
    %1326 = vmatpush1.msra.mxu0 0.0
    %1327 = vmatprep.subr.mxu0 0.0
    %1328 = vmatpush1.msra.mxu0 0.0
    %1329 = vmatprep.subr.mxu0 0.0
    %1330 = vmatpush1.msra.mxu0 0.0
    %1331 = vmatprep.subr.mxu0 0.0
    %1332 = vmatpush1.msra.mxu0 0.0
    %1333 = vmatprep.subr.mxu0 0.0
    %1334 = vmatpush1.msra.mxu0 0.0
    %1335 = vmatprep.subr.mxu0 0.0
    %1336 = vmatpush1.msra.mxu0 0.0
    %1337 = vmatprep.subr.mxu0 0.0
    %1338 = vmatpush1.msra.mxu0 0.0
    %1339 = vmatprep.subr.mxu0 0.0
    %1340 = vmatpush1.msra.mxu0 0.0
    %1341 = vmatprep.subr.mxu0 0.0
    %1342 = vmatpush1.msra.mxu0 0.0
    %1343 = vmatprep.subr.mxu0 0.0
    %1344 = vmatpush1.msra.mxu0 0.0
    %1345 = vmatprep.subr.mxu0 0.0
    %1346 = vmatpush1.msra.mxu0 0.0
    %1347 = vmatprep.subr.mxu0 0.0
    %1348 = vmatpush1.msra.mxu0 0.0
    %1349 = vmatprep.subr.mxu0 0.0
    %1350 = vmatpush1.msra.mxu0 0.0
    %1351 = vmatprep.subr.mxu0 0.0
    %1352 = vmatpush1.msra.mxu0 0.0
    %1353 = vmatprep.subr.mxu0 0.0
    %1354 = vmatpush1.msra.mxu0 0.0
    %1355 = vmatprep.subr.mxu0 0.0
    %1356 = vmatpush1.msra.mxu0 0.0
    %1357 = vmatprep.subr.mxu0 0.0
    %1358 = vmatpush1.msra.mxu0 0.0
    %1359 = vmatprep.subr.mxu0 0.0
    %1360 = vmatpush1.msra.mxu0 0.0
    %1361 = vmatprep.subr.mxu0 0.0
    %1362 = vmatpush1.msra.mxu0 0.0
    %1363 = vmatprep.subr.mxu0 0.0
    %1364 = vmatpush1.msra.mxu0 0.0
    %1365 = vmatprep.subr.mxu0 0.0
    %1366 = vmatpush1.msra.mxu0 0.0
    %1367 = vmatprep.subr.mxu0 0.0
    %1368 = vmatpush1.msra.mxu0 0.0
    %1369 = vmatprep.mubr.f32.mxu0 0.0
    %1370 = vmatmul.mubr.f32.gmra.mrb[0].mxu0 %v1303
    %v1371 = vpop.f32.mrb[0].mxu0
    %v1372 = vadd.f32 0.0, %v1371
    %v1373 = vpop.f32.mrb[0].mxu0
    %1374 = vdwg.mxu0
    %v1375 = vadd.f32 %v1161, %v1299
    %v1376 = vadd.f32 %v57, %v1270
    %v1377 = vmul.f32 %v1376, 0.5
    %v1378 = vsel %vm89, %v1376, %v1377
    %v1379 = vtanh.pop %v1378
    %v1380 = vmul.f32 %v1379, 0.5
    %v1381 = vadd.f32 %v1380, 0.5
    %v1382 = vsel %vm89, %v1379, %v1381
    %v1383 = vmul.f32 %v1382, %v1179
    %1385 = vrot.lane.b32.xlu0 %v1382, 64
    %v1386 = vpop.permute.xlu0 %1385
    %v1388 = vmul.f32 %v1382, %v1386
    %1390 = vrot.lane.b32.xlu0 %v1388, 32
    %v1391 = vpop.permute.xlu0 %1390
    %v1393 = vadd.f32 %v1383, %v1391
    %v1394 = vtanh.pop %v1393
    %1396 = vrot.lane.b32.xlu0 %v1394, 64
    %v1397 = vpop.permute.xlu0 %1396
    %v1399 = vmul.f32 %v1382, %v1397
    %vm1400 = vcmp.gt.f32.partialorder %v1399, 1.0
    %v1401 = vsel %vm1400, 1, 0
    %v1402 = vcvt.s32.f32 %v1401
    %1404 = vrot.lane.b32.xlu0 %v1402, 32
    %v1405 = vpop.permute.xlu0 %1404
    %1408 = vrot.lane.b32.xlu0 %v1399, 64
    %v1409 = vpop.permute.xlu0 %1408
    %v1411 = vsel %vm125, %v1405, %v1409
    %v1413 = vsel %vm127, %v1411, 0
    %1415 = vmatprep.subr.mxu0 %v59
    %1416 = vmatpush1.msra.mxu0 %v58
    %1417 = vmatprep.subr.mxu0 %v61
    %1418 = vmatpush1.msra.mxu0 %v60
    %1419 = vmatprep.subr.mxu0 %v63
    %1420 = vmatpush1.msra.mxu0 %v62
    %1421 = vmatprep.subr.mxu0 %v65
    %1422 = vmatpush1.msra.mxu0 %v64
    %1423 = vmatprep.subr.mxu0 %v67
    %1424 = vmatpush1.msra.mxu0 %v66
    %1425 = vmatprep.subr.mxu0 %v69
    %1426 = vmatpush1.msra.mxu0 %v68
    %1427 = vmatprep.subr.mxu0 %v71
    %1428 = vmatpush1.msra.mxu0 %v70
    %1429 = vmatprep.subr.mxu0 %v73
    %1430 = vmatpush1.msra.mxu0 %v72
    %1431 = vmatprep.subr.mxu0 0.0
    %1432 = vmatpush1.msra.mxu0 0.0
    %1433 = vmatprep.subr.mxu0 0.0
    %1434 = vmatpush1.msra.mxu0 0.0
    %1435 = vmatprep.subr.mxu0 0.0
    %1436 = vmatpush1.msra.mxu0 0.0
    %1437 = vmatprep.subr.mxu0 0.0
    %1438 = vmatpush1.msra.mxu0 0.0
    %1439 = vmatprep.subr.mxu0 0.0
    %1440 = vmatpush1.msra.mxu0 0.0
    %1441 = vmatprep.subr.mxu0 0.0
    %1442 = vmatpush1.msra.mxu0 0.0
    %1443 = vmatprep.subr.mxu0 0.0
    %1444 = vmatpush1.msra.mxu0 0.0
    %1445 = vmatprep.subr.mxu0 0.0
    %1446 = vmatpush1.msra.mxu0 0.0
    %1447 = vmatprep.subr.mxu0 0.0
    %1448 = vmatpush1.msra.mxu0 0.0
    %1449 = vmatprep.subr.mxu0 0.0
    %1450 = vmatpush1.msra.mxu0 0.0
    %1451 = vmatprep.subr.mxu0 0.0
    %1452 = vmatpush1.msra.mxu0 0.0
    %1453 = vmatprep.subr.mxu0 0.0
    %1454 = vmatpush1.msra.mxu0 0.0
    %1455 = vmatprep.subr.mxu0 0.0
    %1456 = vmatpush1.msra.mxu0 0.0
    %1457 = vmatprep.subr.mxu0 0.0
    %1458 = vmatpush1.msra.mxu0 0.0
    %1459 = vmatprep.subr.mxu0 0.0
    %1460 = vmatpush1.msra.mxu0 0.0
    %1461 = vmatprep.subr.mxu0 0.0
    %1462 = vmatpush1.msra.mxu0 0.0
    %1463 = vmatprep.subr.mxu0 0.0
    %1464 = vmatpush1.msra.mxu0 0.0
    %1465 = vmatprep.subr.mxu0 0.0
    %1466 = vmatpush1.msra.mxu0 0.0
    %1467 = vmatprep.subr.mxu0 0.0
    %1468 = vmatpush1.msra.mxu0 0.0
    %1469 = vmatprep.subr.mxu0 0.0
    %1470 = vmatpush1.msra.mxu0 0.0
    %1471 = vmatprep.subr.mxu0 0.0
    %1472 = vmatpush1.msra.mxu0 0.0
    %1473 = vmatprep.subr.mxu0 0.0
    %1474 = vmatpush1.msra.mxu0 0.0
    %1475 = vmatprep.subr.mxu0 0.0
    %1476 = vmatpush1.msra.mxu0 0.0
    %1477 = vmatprep.subr.mxu0 0.0
    %1478 = vmatpush1.msra.mxu0 0.0
    %1479 = vmatprep.mubr.f32.mxu0 0.0
    %1480 = vmatmul.mubr.f32.gmra.mrb[0].mxu0 %v1413
    %v1481 = vpop.f32.mrb[0].mxu0
    %v1482 = vadd.f32 0.0, %v1481
    %v1483 = vpop.f32.mrb[0].mxu0
    %v1484 = vadd.f32 0.0, %v1483
    %1485 = vdwg.mxu0
    %v1486 = vadd.f32 %v1482, %v1372
    %v1487 = vadd.f32 %v1486, %v83
    %v1488 = vmul.f32 %v1487, 0.5
    %v1489 = vsel %vm89, %v1487, %v1488
    %v1490 = vtanh.pop %v1489
    %v1491 = vmul.f32 %v1490, 0.5
    %v1492 = vadd.f32 %v1491, 0.5
    %v1493 = vsel %vm89, %v1490, %v1492
    %v1494 = vmul.f32 %v1493, %v1290
    %1496 = vrot.lane.b32.xlu0 %v1493, 64
    %v1497 = vpop.permute.xlu0 %1496
    %v1499 = vmul.f32 %v1493, %v1497
    %1501 = vrot.lane.b32.xlu0 %v1499, 32
    %v1502 = vpop.permute.xlu0 %1501
    %v1504 = vadd.f32 %v1494, %v1502
    %v1505 = vtanh.pop %v1504
    %1507 = vrot.lane.b32.xlu0 %v1505, 64
    %v1508 = vpop.permute.xlu0 %1507
    %v1510 = vmul.f32 %v1493, %v1508
    %vm1511 = vcmp.gt.f32.partialorder %v1510, 1.0
    %v1512 = vsel %vm1511, 1, 0
    %v1513 = vcvt.s32.f32 %v1512
    %1515 = vrot.lane.b32.xlu0 %v1510, 32
    %v1516 = vpop.permute.xlu0 %1515
    %v1517 = vsel %vm125, %v1516, 0
    %1519 = vmatprep.subr.mxu0 0.0
    %1520 = vmatpush1.msra.mxu0 %v74
    %1521 = vmatprep.subr.mxu0 0.0
    %1522 = vmatpush1.msra.mxu0 %v75
    %1523 = vmatprep.subr.mxu0 0.0
    %1524 = vmatpush1.msra.mxu0 %v76
    %1525 = vmatprep.subr.mxu0 0.0
    %1526 = vmatpush1.msra.mxu0 %v77
    %1527 = vmatprep.subr.mxu0 0.0
    %1528 = vmatpush1.msra.mxu0 0.0
    %1529 = vmatprep.subr.mxu0 0.0
    %1530 = vmatpush1.msra.mxu0 0.0
    %1531 = vmatprep.subr.mxu0 0.0
    %1532 = vmatpush1.msra.mxu0 0.0
    %1533 = vmatprep.subr.mxu0 0.0
    %1534 = vmatpush1.msra.mxu0 0.0
    %1535 = vmatprep.subr.mxu0 0.0
    %1536 = vmatpush1.msra.mxu0 0.0
    %1537 = vmatprep.subr.mxu0 0.0
    %1538 = vmatpush1.msra.mxu0 0.0
    %1539 = vmatprep.subr.mxu0 0.0
    %1540 = vmatpush1.msra.mxu0 0.0
    %1541 = vmatprep.subr.mxu0 0.0
    %1542 = vmatpush1.msra.mxu0 0.0
    %1543 = vmatprep.subr.mxu0 0.0
    %1544 = vmatpush1.msra.mxu0 0.0
    %1545 = vmatprep.subr.mxu0 0.0
    %1546 = vmatpush1.msra.mxu0 0.0
    %1547 = vmatprep.subr.mxu0 0.0
    %1548 = vmatpush1.msra.mxu0 0.0
    %1549 = vmatprep.subr.mxu0 0.0
    %1550 = vmatpush1.msra.mxu0 0.0
    %1551 = vmatprep.subr.mxu0 0.0
    %1552 = vmatpush1.msra.mxu0 0.0
    %1553 = vmatprep.subr.mxu0 0.0
    %1554 = vmatpush1.msra.mxu0 0.0
    %1555 = vmatprep.subr.mxu0 0.0
    %1556 = vmatpush1.msra.mxu0 0.0
    %1557 = vmatprep.subr.mxu0 0.0
    %1558 = vmatpush1.msra.mxu0 0.0
    %1559 = vmatprep.subr.mxu0 0.0
    %1560 = vmatpush1.msra.mxu0 0.0
    %1561 = vmatprep.subr.mxu0 0.0
    %1562 = vmatpush1.msra.mxu0 0.0
    %1563 = vmatprep.subr.mxu0 0.0
    %1564 = vmatpush1.msra.mxu0 0.0
    %1565 = vmatprep.subr.mxu0 0.0
    %1566 = vmatpush1.msra.mxu0 0.0
    %1567 = vmatprep.subr.mxu0 0.0
    %1568 = vmatpush1.msra.mxu0 0.0
    %1569 = vmatprep.subr.mxu0 0.0
    %1570 = vmatpush1.msra.mxu0 0.0
    %1571 = vmatprep.subr.mxu0 0.0
    %1572 = vmatpush1.msra.mxu0 0.0
    %1573 = vmatprep.subr.mxu0 0.0
    %1574 = vmatpush1.msra.mxu0 0.0
    %1575 = vmatprep.subr.mxu0 0.0
    %1576 = vmatpush1.msra.mxu0 0.0
    %1577 = vmatprep.subr.mxu0 0.0
    %1578 = vmatpush1.msra.mxu0 0.0
    %1579 = vmatprep.subr.mxu0 0.0
    %1580 = vmatpush1.msra.mxu0 0.0
    %1581 = vmatprep.subr.mxu0 0.0
    %1582 = vmatpush1.msra.mxu0 0.0
    %1583 = vmatprep.mubr.f32.mxu0 0.0
    %1584 = vmatmul.mubr.f32.gmra.mrb[0].mxu0 %v1517
    %v1585 = vpop.f32.mrb[0].mxu0
    %v1586 = vadd.f32 0.0, %v1585
    %v1587 = vpop.f32.mrb[0].mxu0
    %1588 = vdwg.mxu0
    %v1589 = vadd.f32 %v1375, %v1513
    %v1590 = vadd.f32 %v57, %v1484
    %v1591 = vmul.f32 %v1590, 0.5
    %v1592 = vsel %vm89, %v1590, %v1591
    %v1593 = vtanh.pop %v1592
    %v1594 = vmul.f32 %v1593, 0.5
    %v1595 = vadd.f32 %v1594, 0.5
    %v1596 = vsel %vm89, %v1593, %v1595
    %v1597 = vmul.f32 %v1596, %v1393
    %1599 = vrot.lane.b32.xlu0 %v1596, 64
    %v1600 = vpop.permute.xlu0 %1599
    %v1602 = vmul.f32 %v1596, %v1600
    %1604 = vrot.lane.b32.xlu0 %v1602, 32
    %v1605 = vpop.permute.xlu0 %1604
    %v1607 = vadd.f32 %v1597, %v1605
    %v1608 = vtanh.pop %v1607
    %1610 = vrot.lane.b32.xlu0 %v1608, 64
    %v1611 = vpop.permute.xlu0 %1610
    %v1613 = vmul.f32 %v1596, %v1611
    %vm1614 = vcmp.gt.f32.partialorder %v1613, 1.0
    %v1615 = vsel %vm1614, 1, 0
    %v1616 = vcvt.s32.f32 %v1615
    %1618 = vrot.lane.b32.xlu0 %v1616, 32
    %v1619 = vpop.permute.xlu0 %1618
    %1622 = vrot.lane.b32.xlu0 %v1613, 64
    %v1623 = vpop.permute.xlu0 %1622
    %v1625 = vsel %vm125, %v1619, %v1623
    %v1627 = vsel %vm127, %v1625, 0
    %1629 = vmatprep.subr.mxu0 %v59
    %1630 = vmatpush1.msra.mxu0 %v58
    %1631 = vmatprep.subr.mxu0 %v61
    %1632 = vmatpush1.msra.mxu0 %v60
    %1633 = vmatprep.subr.mxu0 %v63
    %1634 = vmatpush1.msra.mxu0 %v62
    %1635 = vmatprep.subr.mxu0 %v65
    %1636 = vmatpush1.msra.mxu0 %v64
    %1637 = vmatprep.subr.mxu0 %v67
    %1638 = vmatpush1.msra.mxu0 %v66
    %1639 = vmatprep.subr.mxu0 %v69
    %1640 = vmatpush1.msra.mxu0 %v68
    %1641 = vmatprep.subr.mxu0 %v71
    %1642 = vmatpush1.msra.mxu0 %v70
    %1643 = vmatprep.subr.mxu0 %v73
    %1644 = vmatpush1.msra.mxu0 %v72
    %1645 = vmatprep.subr.mxu0 0.0
    %1646 = vmatpush1.msra.mxu0 0.0
    %1647 = vmatprep.subr.mxu0 0.0
    %1648 = vmatpush1.msra.mxu0 0.0
    %1649 = vmatprep.subr.mxu0 0.0
    %1650 = vmatpush1.msra.mxu0 0.0
    %1651 = vmatprep.subr.mxu0 0.0
    %1652 = vmatpush1.msra.mxu0 0.0
    %1653 = vmatprep.subr.mxu0 0.0
    %1654 = vmatpush1.msra.mxu0 0.0
    %1655 = vmatprep.subr.mxu0 0.0
    %1656 = vmatpush1.msra.mxu0 0.0
    %1657 = vmatprep.subr.mxu0 0.0
    %1658 = vmatpush1.msra.mxu0 0.0
    %1659 = vmatprep.subr.mxu0 0.0
    %1660 = vmatpush1.msra.mxu0 0.0
    %1661 = vmatprep.subr.mxu0 0.0
    %1662 = vmatpush1.msra.mxu0 0.0
    %1663 = vmatprep.subr.mxu0 0.0
    %1664 = vmatpush1.msra.mxu0 0.0
    %1665 = vmatprep.subr.mxu0 0.0
    %1666 = vmatpush1.msra.mxu0 0.0
    %1667 = vmatprep.subr.mxu0 0.0
    %1668 = vmatpush1.msra.mxu0 0.0
    %1669 = vmatprep.subr.mxu0 0.0
    %1670 = vmatpush1.msra.mxu0 0.0
    %1671 = vmatprep.subr.mxu0 0.0
    %1672 = vmatpush1.msra.mxu0 0.0
    %1673 = vmatprep.subr.mxu0 0.0
    %1674 = vmatpush1.msra.mxu0 0.0
    %1675 = vmatprep.subr.mxu0 0.0
    %1676 = vmatpush1.msra.mxu0 0.0
    %1677 = vmatprep.subr.mxu0 0.0
    %1678 = vmatpush1.msra.mxu0 0.0
    %1679 = vmatprep.subr.mxu0 0.0
    %1680 = vmatpush1.msra.mxu0 0.0
    %1681 = vmatprep.subr.mxu0 0.0
    %1682 = vmatpush1.msra.mxu0 0.0
    %1683 = vmatprep.subr.mxu0 0.0
    %1684 = vmatpush1.msra.mxu0 0.0
    %1685 = vmatprep.subr.mxu0 0.0
    %1686 = vmatpush1.msra.mxu0 0.0
    %1687 = vmatprep.subr.mxu0 0.0
    %1688 = vmatpush1.msra.mxu0 0.0
    %1689 = vmatprep.subr.mxu0 0.0
    %1690 = vmatpush1.msra.mxu0 0.0
    %1691 = vmatprep.subr.mxu0 0.0
    %1692 = vmatpush1.msra.mxu0 0.0
    %1693 = vmatprep.mubr.f32.mxu0 0.0
    %1694 = vmatmul.mubr.f32.gmra.mrb[0].mxu0 %v1627
    %v1695 = vpop.f32.mrb[0].mxu0
    %v1696 = vadd.f32 0.0, %v1695
    %v1697 = vpop.f32.mrb[0].mxu0
    %v1698 = vadd.f32 0.0, %v1697
    %1699 = vdwg.mxu0
    %v1700 = vadd.f32 %v1696, %v1586
    %v1701 = vadd.f32 %v1700, %v83
    %v1702 = vmul.f32 %v1701, 0.5
    %v1703 = vsel %vm89, %v1701, %v1702
    %v1704 = vtanh.pop %v1703
    %v1705 = vmul.f32 %v1704, 0.5
    %v1706 = vadd.f32 %v1705, 0.5
    %v1707 = vsel %vm89, %v1704, %v1706
    %v1708 = vmul.f32 %v1707, %v1504
    %1710 = vrot.lane.b32.xlu0 %v1707, 64
    %v1711 = vpop.permute.xlu0 %1710
    %v1713 = vmul.f32 %v1707, %v1711
    %1715 = vrot.lane.b32.xlu0 %v1713, 32
    %v1716 = vpop.permute.xlu0 %1715
    %v1718 = vadd.f32 %v1708, %v1716
    %v1719 = vtanh.pop %v1718
    %1721 = vrot.lane.b32.xlu0 %v1719, 64
    %v1722 = vpop.permute.xlu0 %1721
    %v1724 = vmul.f32 %v1707, %v1722
    %vm1725 = vcmp.gt.f32.partialorder %v1724, 1.0
    %v1726 = vsel %vm1725, 1, 0
    %v1727 = vcvt.s32.f32 %v1726
    %1729 = vrot.lane.b32.xlu0 %v1724, 32
    %v1730 = vpop.permute.xlu0 %1729
    %v1731 = vsel %vm125, %v1730, 0
    %1733 = vmatprep.subr.mxu0 0.0
    %1734 = vmatpush1.msra.mxu0 %v74
    %1735 = vmatprep.subr.mxu0 0.0
    %1736 = vmatpush1.msra.mxu0 %v75
    %1737 = vmatprep.subr.mxu0 0.0
    %1738 = vmatpush1.msra.mxu0 %v76
    %1739 = vmatprep.subr.mxu0 0.0
    %1740 = vmatpush1.msra.mxu0 %v77
    %1741 = vmatprep.subr.mxu0 0.0
    %1742 = vmatpush1.msra.mxu0 0.0
    %1743 = vmatprep.subr.mxu0 0.0
    %1744 = vmatpush1.msra.mxu0 0.0
    %1745 = vmatprep.subr.mxu0 0.0
    %1746 = vmatpush1.msra.mxu0 0.0
    %1747 = vmatprep.subr.mxu0 0.0
    %1748 = vmatpush1.msra.mxu0 0.0
    %1749 = vmatprep.subr.mxu0 0.0
    %1750 = vmatpush1.msra.mxu0 0.0
    %1751 = vmatprep.subr.mxu0 0.0
    %1752 = vmatpush1.msra.mxu0 0.0
    %1753 = vmatprep.subr.mxu0 0.0
    %1754 = vmatpush1.msra.mxu0 0.0
    %1755 = vmatprep.subr.mxu0 0.0
    %1756 = vmatpush1.msra.mxu0 0.0
    %1757 = vmatprep.subr.mxu0 0.0
    %1758 = vmatpush1.msra.mxu0 0.0
    %1759 = vmatprep.subr.mxu0 0.0
    %1760 = vmatpush1.msra.mxu0 0.0
    %1761 = vmatprep.subr.mxu0 0.0
    %1762 = vmatpush1.msra.mxu0 0.0
    %1763 = vmatprep.subr.mxu0 0.0
    %1764 = vmatpush1.msra.mxu0 0.0
    %1765 = vmatprep.subr.mxu0 0.0
    %1766 = vmatpush1.msra.mxu0 0.0
    %1767 = vmatprep.subr.mxu0 0.0
    %1768 = vmatpush1.msra.mxu0 0.0
    %1769 = vmatprep.subr.mxu0 0.0
    %1770 = vmatpush1.msra.mxu0 0.0
    %1771 = vmatprep.subr.mxu0 0.0
    %1772 = vmatpush1.msra.mxu0 0.0
    %1773 = vmatprep.subr.mxu0 0.0
    %1774 = vmatpush1.msra.mxu0 0.0
    %1775 = vmatprep.subr.mxu0 0.0
    %1776 = vmatpush1.msra.mxu0 0.0
    %1777 = vmatprep.subr.mxu0 0.0
    %1778 = vmatpush1.msra.mxu0 0.0
    %1779 = vmatprep.subr.mxu0 0.0
    %1780 = vmatpush1.msra.mxu0 0.0
    %1781 = vmatprep.subr.mxu0 0.0
    %1782 = vmatpush1.msra.mxu0 0.0
    %1783 = vmatprep.subr.mxu0 0.0
    %1784 = vmatpush1.msra.mxu0 0.0
    %1785 = vmatprep.subr.mxu0 0.0
    %1786 = vmatpush1.msra.mxu0 0.0
    %1787 = vmatprep.subr.mxu0 0.0
    %1788 = vmatpush1.msra.mxu0 0.0
    %1789 = vmatprep.subr.mxu0 0.0
    %1790 = vmatpush1.msra.mxu0 0.0
    %1791 = vmatprep.subr.mxu0 0.0
    %1792 = vmatpush1.msra.mxu0 0.0
    %1793 = vmatprep.subr.mxu0 0.0
    %1794 = vmatpush1.msra.mxu0 0.0
    %1795 = vmatprep.subr.mxu0 0.0
    %1796 = vmatpush1.msra.mxu0 0.0
    %1797 = vmatprep.mubr.f32.mxu0 0.0
    %1798 = vmatmul.mubr.f32.gmra.mrb[0].mxu0 %v1731
    %v1799 = vpop.f32.mrb[0].mxu0
    %v1800 = vadd.f32 0.0, %v1799
    %v1801 = vpop.f32.mrb[0].mxu0
    %1802 = vdwg.mxu0
    %v1803 = vadd.f32 %v1589, %v1727
    %v1804 = vadd.f32 %v57, %v1698
    %v1805 = vmul.f32 %v1804, 0.5
    %v1806 = vsel %vm89, %v1804, %v1805
    %v1807 = vtanh.pop %v1806
    %v1808 = vmul.f32 %v1807, 0.5
    %v1809 = vadd.f32 %v1808, 0.5
    %v1810 = vsel %vm89, %v1807, %v1809
    %v1811 = vmul.f32 %v1810, %v1607
    %1813 = vrot.lane.b32.xlu0 %v1810, 64
    %v1814 = vpop.permute.xlu0 %1813
    %v1816 = vmul.f32 %v1810, %v1814
    %1818 = vrot.lane.b32.xlu0 %v1816, 32
    %v1819 = vpop.permute.xlu0 %1818
    %v1821 = vadd.f32 %v1811, %v1819
    %v1822 = vtanh.pop %v1821
    %1824 = vrot.lane.b32.xlu0 %v1822, 64
    %v1825 = vpop.permute.xlu0 %1824
    %v1827 = vmul.f32 %v1810, %v1825
    %vm1828 = vcmp.gt.f32.partialorder %v1827, 1.0
    %v1829 = vsel %vm1828, 1, 0
    %v1830 = vcvt.s32.f32 %v1829
    %1832 = vrot.lane.b32.xlu0 %v1830, 32
    %v1833 = vpop.permute.xlu0 %1832
    %1836 = vrot.lane.b32.xlu0 %v1827, 64
    %v1837 = vpop.permute.xlu0 %1836
    %v1839 = vsel %vm125, %v1833, %v1837
    %v1841 = vsel %vm127, %v1839, 0
    %1843 = vmatprep.subr.mxu0 %v59
    %1844 = vmatpush1.msra.mxu0 %v58
    %1845 = vmatprep.subr.mxu0 %v61
    %1846 = vmatpush1.msra.mxu0 %v60
    %1847 = vmatprep.subr.mxu0 %v63
    %1848 = vmatpush1.msra.mxu0 %v62
    %1849 = vmatprep.subr.mxu0 %v65
    %1850 = vmatpush1.msra.mxu0 %v64
    %1851 = vmatprep.subr.mxu0 %v67
    %1852 = vmatpush1.msra.mxu0 %v66
    %1853 = vmatprep.subr.mxu0 %v69
    %1854 = vmatpush1.msra.mxu0 %v68
    %1855 = vmatprep.subr.mxu0 %v71
    %1856 = vmatpush1.msra.mxu0 %v70
    %1857 = vmatprep.subr.mxu0 %v73
    %1858 = vmatpush1.msra.mxu0 %v72
    %1859 = vmatprep.subr.mxu0 0.0
    %1860 = vmatpush1.msra.mxu0 0.0
    %1861 = vmatprep.subr.mxu0 0.0
    %1862 = vmatpush1.msra.mxu0 0.0
    %1863 = vmatprep.subr.mxu0 0.0
    %1864 = vmatpush1.msra.mxu0 0.0
    %1865 = vmatprep.subr.mxu0 0.0
    %1866 = vmatpush1.msra.mxu0 0.0
    %1867 = vmatprep.subr.mxu0 0.0
    %1868 = vmatpush1.msra.mxu0 0.0
    %1869 = vmatprep.subr.mxu0 0.0
    %1870 = vmatpush1.msra.mxu0 0.0
    %1871 = vmatprep.subr.mxu0 0.0
    %1872 = vmatpush1.msra.mxu0 0.0
    %1873 = vmatprep.subr.mxu0 0.0
    %1874 = vmatpush1.msra.mxu0 0.0
    %1875 = vmatprep.subr.mxu0 0.0
    %1876 = vmatpush1.msra.mxu0 0.0
    %1877 = vmatprep.subr.mxu0 0.0
    %1878 = vmatpush1.msra.mxu0 0.0
    %1879 = vmatprep.subr.mxu0 0.0
    %1880 = vmatpush1.msra.mxu0 0.0
    %1881 = vmatprep.subr.mxu0 0.0
    %1882 = vmatpush1.msra.mxu0 0.0
    %1883 = vmatprep.subr.mxu0 0.0
    %1884 = vmatpush1.msra.mxu0 0.0
    %1885 = vmatprep.subr.mxu0 0.0
    %1886 = vmatpush1.msra.mxu0 0.0
    %1887 = vmatprep.subr.mxu0 0.0
    %1888 = vmatpush1.msra.mxu0 0.0
    %1889 = vmatprep.subr.mxu0 0.0
    %1890 = vmatpush1.msra.mxu0 0.0
    %1891 = vmatprep.subr.mxu0 0.0
    %1892 = vmatpush1.msra.mxu0 0.0
    %1893 = vmatprep.subr.mxu0 0.0
    %1894 = vmatpush1.msra.mxu0 0.0
    %1895 = vmatprep.subr.mxu0 0.0
    %1896 = vmatpush1.msra.mxu0 0.0
    %1897 = vmatprep.subr.mxu0 0.0
    %1898 = vmatpush1.msra.mxu0 0.0
    %1899 = vmatprep.subr.mxu0 0.0
    %1900 = vmatpush1.msra.mxu0 0.0
    %1901 = vmatprep.subr.mxu0 0.0
    %1902 = vmatpush1.msra.mxu0 0.0
    %1903 = vmatprep.subr.mxu0 0.0
    %1904 = vmatpush1.msra.mxu0 0.0
    %1905 = vmatprep.subr.mxu0 0.0
    %1906 = vmatpush1.msra.mxu0 0.0
    %1907 = vmatprep.mubr.f32.mxu0 0.0
    %1908 = vmatmul.mubr.f32.gmra.mrb[0].mxu0 %v1841
    %v1909 = vpop.f32.mrb[0].mxu0
    %v1910 = vadd.f32 0.0, %v1909
    %v1911 = vpop.f32.mrb[0].mxu0
    %v1912 = vadd.f32 0.0, %v1911
    %1913 = vdwg.mxu0
    %v1914 = vadd.f32 %v1910, %v1800
    %v1915 = vadd.f32 %v1914, %v83
    %v1916 = vmul.f32 %v1915, 0.5
    %v1917 = vsel %vm89, %v1915, %v1916
    %v1918 = vtanh.pop %v1917
    %v1919 = vmul.f32 %v1918, 0.5
    %v1920 = vadd.f32 %v1919, 0.5
    %v1921 = vsel %vm89, %v1918, %v1920
    %v1922 = vmul.f32 %v1921, %v1718
    %1924 = vrot.lane.b32.xlu0 %v1921, 64
    %v1925 = vpop.permute.xlu0 %1924
    %v1927 = vmul.f32 %v1921, %v1925
    %1929 = vrot.lane.b32.xlu0 %v1927, 32
    %v1930 = vpop.permute.xlu0 %1929
    %v1932 = vadd.f32 %v1922, %v1930
    %v1933 = vtanh.pop %v1932
    %1935 = vrot.lane.b32.xlu0 %v1933, 64
    %v1936 = vpop.permute.xlu0 %1935
    %v1938 = vmul.f32 %v1921, %v1936
    %vm1939 = vcmp.gt.f32.partialorder %v1938, 1.0
    %v1940 = vsel %vm1939, 1, 0
    %v1941 = vcvt.s32.f32 %v1940
    %1943 = vrot.lane.b32.xlu0 %v1938, 32
    %v1944 = vpop.permute.xlu0 %1943
    %v1945 = vsel %vm125, %v1944, 0
    %1947 = vmatprep.subr.mxu0 0.0
    %1948 = vmatpush1.msra.mxu0 %v74
    %1949 = vmatprep.subr.mxu0 0.0
    %1950 = vmatpush1.msra.mxu0 %v75
    %1951 = vmatprep.subr.mxu0 0.0
    %1952 = vmatpush1.msra.mxu0 %v76
    %1953 = vmatprep.subr.mxu0 0.0
    %1954 = vmatpush1.msra.mxu0 %v77
    %1955 = vmatprep.subr.mxu0 0.0
    %1956 = vmatpush1.msra.mxu0 0.0
    %1957 = vmatprep.subr.mxu0 0.0
    %1958 = vmatpush1.msra.mxu0 0.0
    %1959 = vmatprep.subr.mxu0 0.0
    %1960 = vmatpush1.msra.mxu0 0.0
    %1961 = vmatprep.subr.mxu0 0.0
    %1962 = vmatpush1.msra.mxu0 0.0
    %1963 = vmatprep.subr.mxu0 0.0
    %1964 = vmatpush1.msra.mxu0 0.0
    %1965 = vmatprep.subr.mxu0 0.0
    %1966 = vmatpush1.msra.mxu0 0.0
    %1967 = vmatprep.subr.mxu0 0.0
    %1968 = vmatpush1.msra.mxu0 0.0
    %1969 = vmatprep.subr.mxu0 0.0
    %1970 = vmatpush1.msra.mxu0 0.0
    %1971 = vmatprep.subr.mxu0 0.0
    %1972 = vmatpush1.msra.mxu0 0.0
    %1973 = vmatprep.subr.mxu0 0.0
    %1974 = vmatpush1.msra.mxu0 0.0
    %1975 = vmatprep.subr.mxu0 0.0
    %1976 = vmatpush1.msra.mxu0 0.0
    %1977 = vmatprep.subr.mxu0 0.0
    %1978 = vmatpush1.msra.mxu0 0.0
    %1979 = vmatprep.subr.mxu0 0.0
    %1980 = vmatpush1.msra.mxu0 0.0
    %1981 = vmatprep.subr.mxu0 0.0
    %1982 = vmatpush1.msra.mxu0 0.0
    %1983 = vmatprep.subr.mxu0 0.0
    %1984 = vmatpush1.msra.mxu0 0.0
    %1985 = vmatprep.subr.mxu0 0.0
    %1986 = vmatpush1.msra.mxu0 0.0
    %1987 = vmatprep.subr.mxu0 0.0
    %1988 = vmatpush1.msra.mxu0 0.0
    %1989 = vmatprep.subr.mxu0 0.0
    %1990 = vmatpush1.msra.mxu0 0.0
    %1991 = vmatprep.subr.mxu0 0.0
    %1992 = vmatpush1.msra.mxu0 0.0
    %1993 = vmatprep.subr.mxu0 0.0
    %1994 = vmatpush1.msra.mxu0 0.0
    %1995 = vmatprep.subr.mxu0 0.0
    %1996 = vmatpush1.msra.mxu0 0.0
    %1997 = vmatprep.subr.mxu0 0.0
    %1998 = vmatpush1.msra.mxu0 0.0
    %1999 = vmatprep.subr.mxu0 0.0
    %2000 = vmatpush1.msra.mxu0 0.0
    %2001 = vmatprep.subr.mxu0 0.0
    %2002 = vmatpush1.msra.mxu0 0.0
    %2003 = vmatprep.subr.mxu0 0.0
    %2004 = vmatpush1.msra.mxu0 0.0
    %2005 = vmatprep.subr.mxu0 0.0
    %2006 = vmatpush1.msra.mxu0 0.0
    %2007 = vmatprep.subr.mxu0 0.0
    %2008 = vmatpush1.msra.mxu0 0.0
    %2009 = vmatprep.subr.mxu0 0.0
    %2010 = vmatpush1.msra.mxu0 0.0
    %2011 = vmatprep.mubr.f32.mxu0 0.0
    %2012 = vmatmul.mubr.f32.gmra.mrb[0].mxu0 %v1945
    %v2013 = vpop.f32.mrb[0].mxu0
    %v2014 = vadd.f32 0.0, %v2013
    %v2015 = vpop.f32.mrb[0].mxu0
    %2016 = vdwg.mxu0
    %v2017 = vadd.f32 %v1803, %v1941
    %v2018 = vadd.f32 %v57, %v1912
    %v2019 = vmul.f32 %v2018, 0.5
    %v2020 = vsel %vm89, %v2018, %v2019
    %v2021 = vtanh.pop %v2020
    %v2022 = vmul.f32 %v2021, 0.5
    %v2023 = vadd.f32 %v2022, 0.5
    %v2024 = vsel %vm89, %v2021, %v2023
    %v2025 = vmul.f32 %v2024, %v1821
    %2027 = vrot.lane.b32.xlu0 %v2024, 64
    %v2028 = vpop.permute.xlu0 %2027
    %v2030 = vmul.f32 %v2024, %v2028
    %2032 = vrot.lane.b32.xlu0 %v2030, 32
    %v2033 = vpop.permute.xlu0 %2032
    %v2035 = vadd.f32 %v2025, %v2033
    %v2036 = vtanh.pop %v2035
    %2038 = vrot.lane.b32.xlu0 %v2036, 64
    %v2039 = vpop.permute.xlu0 %2038
    %v2041 = vmul.f32 %v2024, %v2039
    %vm2042 = vcmp.gt.f32.partialorder %v2041, 1.0
    %v2043 = vsel %vm2042, 1, 0
    %v2044 = vcvt.s32.f32 %v2043
    %2046 = vrot.lane.b32.xlu0 %v2044, 32
    %v2047 = vpop.permute.xlu0 %2046
    %2050 = vrot.lane.b32.xlu0 %v2041, 64
    %v2051 = vpop.permute.xlu0 %2050
    %v2053 = vsel %vm125, %v2047, %v2051
    %v2055 = vsel %vm127, %v2053, 0
    %2057 = vmatprep.subr.mxu0 %v59
    %2058 = vmatpush1.msra.mxu0 %v58
    %2059 = vmatprep.subr.mxu0 %v61
    %2060 = vmatpush1.msra.mxu0 %v60
    %2061 = vmatprep.subr.mxu0 %v63
    %2062 = vmatpush1.msra.mxu0 %v62
    %2063 = vmatprep.subr.mxu0 %v65
    %2064 = vmatpush1.msra.mxu0 %v64
    %2065 = vmatprep.subr.mxu0 %v67
    %2066 = vmatpush1.msra.mxu0 %v66
    %2067 = vmatprep.subr.mxu0 %v69
    %2068 = vmatpush1.msra.mxu0 %v68
    %2069 = vmatprep.subr.mxu0 %v71
    %2070 = vmatpush1.msra.mxu0 %v70
    %2071 = vmatprep.subr.mxu0 %v73
    %2072 = vmatpush1.msra.mxu0 %v72
    %2073 = vmatprep.subr.mxu0 0.0
    %2074 = vmatpush1.msra.mxu0 0.0
    %2075 = vmatprep.subr.mxu0 0.0
    %2076 = vmatpush1.msra.mxu0 0.0
    %2077 = vmatprep.subr.mxu0 0.0
    %2078 = vmatpush1.msra.mxu0 0.0
    %2079 = vmatprep.subr.mxu0 0.0
    %2080 = vmatpush1.msra.mxu0 0.0
    %2081 = vmatprep.subr.mxu0 0.0
    %2082 = vmatpush1.msra.mxu0 0.0
    %2083 = vmatprep.subr.mxu0 0.0
    %2084 = vmatpush1.msra.mxu0 0.0
    %2085 = vmatprep.subr.mxu0 0.0
    %2086 = vmatpush1.msra.mxu0 0.0
    %2087 = vmatprep.subr.mxu0 0.0
    %2088 = vmatpush1.msra.mxu0 0.0
    %2089 = vmatprep.subr.mxu0 0.0
    %2090 = vmatpush1.msra.mxu0 0.0
    %2091 = vmatprep.subr.mxu0 0.0
    %2092 = vmatpush1.msra.mxu0 0.0
    %2093 = vmatprep.subr.mxu0 0.0
    %2094 = vmatpush1.msra.mxu0 0.0
    %2095 = vmatprep.subr.mxu0 0.0
    %2096 = vmatpush1.msra.mxu0 0.0
    %2097 = vmatprep.subr.mxu0 0.0
    %2098 = vmatpush1.msra.mxu0 0.0
    %2099 = vmatprep.subr.mxu0 0.0
    %2100 = vmatpush1.msra.mxu0 0.0
    %2101 = vmatprep.subr.mxu0 0.0
    %2102 = vmatpush1.msra.mxu0 0.0
    %2103 = vmatprep.subr.mxu0 0.0
    %2104 = vmatpush1.msra.mxu0 0.0
    %2105 = vmatprep.subr.mxu0 0.0
    %2106 = vmatpush1.msra.mxu0 0.0
    %2107 = vmatprep.subr.mxu0 0.0
    %2108 = vmatpush1.msra.mxu0 0.0
    %2109 = vmatprep.subr.mxu0 0.0
    %2110 = vmatpush1.msra.mxu0 0.0
    %2111 = vmatprep.subr.mxu0 0.0
    %2112 = vmatpush1.msra.mxu0 0.0
    %2113 = vmatprep.subr.mxu0 0.0
    %2114 = vmatpush1.msra.mxu0 0.0
    %2115 = vmatprep.subr.mxu0 0.0
    %2116 = vmatpush1.msra.mxu0 0.0
    %2117 = vmatprep.subr.mxu0 0.0
    %2118 = vmatpush1.msra.mxu0 0.0
    %2119 = vmatprep.subr.mxu0 0.0
    %2120 = vmatpush1.msra.mxu0 0.0
    %2121 = vmatprep.mubr.f32.mxu0 0.0
    %2122 = vmatmul.mubr.f32.gmra.mrb[0].mxu0 %v2055
    %v2123 = vpop.f32.mrb[0].mxu0
    %v2124 = vadd.f32 0.0, %v2123
    %v2125 = vpop.f32.mrb[0].mxu0
    %2126 = vdwg.mxu0
    %v2127 = vadd.f32 %v2124, %v2014
    %v2128 = vadd.f32 %v2127, %v83
    %v2129 = vmul.f32 %v2128, 0.5
    %v2130 = vsel %vm89, %v2128, %v2129
    %v2131 = vtanh.pop %v2130
    %v2132 = vmul.f32 %v2131, 0.5
    %v2133 = vadd.f32 %v2132, 0.5
    %v2134 = vsel %vm89, %v2131, %v2133
    %v2135 = vmul.f32 %v2134, %v1932
    %2137 = vrot.lane.b32.xlu0 %v2134, 64
    %v2138 = vpop.permute.xlu0 %2137
    %v2140 = vmul.f32 %v2134, %v2138
    %2142 = vrot.lane.b32.xlu0 %v2140, 32
    %v2143 = vpop.permute.xlu0 %2142
    %v2145 = vadd.f32 %v2135, %v2143
    %v2146 = vtanh.pop %v2145
    %2148 = vrot.lane.b32.xlu0 %v2146, 64
    %v2149 = vpop.permute.xlu0 %2148
    %v2151 = vmul.f32 %v2134, %v2149
    %vm2152 = vcmp.gt.f32.partialorder %v2151, 1.0
    %v2153 = vsel %vm2152, 1, 0
    %v2154 = vcvt.s32.f32 %v2153
    %v2155 = vadd.f32 %v2017, %v2154
    %v2156 = vmul.f32 %v2155, 0.1
    %2158 = vrot.lane.b32.xlu0 %v2156, 32
    %v2159 = vpop.permute.xlu0 %2158
    %vm2161 = vcmask 254976
    %2162 = vst.msk [vmem:[#allocation8] sm:$0x3] %vm2161, %v2159
    // Predicated region
    $region30: #{tpu_custom_call.1} parent=1 // pred_check
      _
    $region31: #{tpu_custom_call.1} parent=1 // pred_check_branch
      %2164 = sbr.rel (0) target = $region33
    $region32: #{tpu_custom_call.1} parent=1 // pred_region
      %s2166 = ssub.s32 32, 32
      %2167 = vsyncadd [#allocation4], %s2166
      %s2169 = sshll.u32 [#allocation8], 4
      %s2170 = int_to_ptr.vmem [resolvable:$true] %s2169
      %2172 = dma.vmem_to_hbm [thread:$0]  %s2170, 32, %s4, [#allocation4]
    $region33: #{tpu_custom_call.1} parent=1 // pred_fallthru
      _
    // Predicated region
    $region34: #{tpu_custom_call.1} parent=1 // pred_check
      _
    $region35: #{tpu_custom_call.1} parent=1 // pred_check_branch
      %2174 = sbr.rel (0) target = $region37
    $region36: #{tpu_custom_call.1} parent=1 // pred_region
      %2175 = dma.done [#allocation4], 32
    $region37: #{tpu_custom_call.1} parent=1 // pred_fallthru
      _
    %2176 = vsyncpa [#allocation3], 1
    %2177 = vsyncpa [#allocation6], 1
    %2178 = vsyncpa [#allocation4], 1

</llo_original>
